<compile_context>
chip_gen: v6e
topology: v6e:2x2x1
jax: 0.10.0
libtpu: 0.0.40
codegen_flags: <defaults>
</compile_context>

<pallas_src>
import numpy as np

import jax
import jax.numpy as jnp
from jax.experimental import pallas as pl
from jax.experimental.pallas import tpu as pltpu

BLOCK_SIZE = 32
KGROUP = 4                      # block-columns packed per K slot -> K = 128


def _round_up(v, m):
    return ((v + m - 1) // m) * m


def _bsl_kernel(cidx_ref, wslot_ref, ngrp_ref,
                x0_ref, x1_ref, x2_ref, x3_ref, w_ref, b_ref,
                o_ref, xbuf_ref):
    """grid = (batch_tiles, out_tiles, K_slots)."""
    j = pl.program_id(1)          # output tile
    k = pl.program_id(2)          # compressed-K slot within this output tile

    @pl.when(k == 0)
    def _init():
        # Fused bias: initialise the resident f32 output tile with the bias.
        o_ref[...] = jnp.broadcast_to(b_ref[...], o_ref.shape)

    # Skip padded slots (their clamped DMAs re-fetch real, non-zero slabs,
    # so this guard is required for correctness).
    @pl.when(k < ngrp_ref[j])
    def _acc():
        bs = BLOCK_SIZE
        # Assemble a lane-dense (tm, 128) bf16 operand from the 4 gathered
        # 32-wide input block-columns (static lane-slice stores into VMEM).
        xbuf_ref[:, 0 * bs:1 * bs] = x0_ref[...]
        xbuf_ref[:, 1 * bs:2 * bs] = x1_ref[...]
        xbuf_ref[:, 2 * bs:3 * bs] = x2_ref[...]
        xbuf_ref[:, 3 * bs:4 * bs] = x3_ref[...]
        # (tm,128) @ (128,tn) on the MXU, f32 accumulation into the resident
        # output tile.
        o_ref[...] += jnp.dot(xbuf_ref[...], w_ref[...],
                              preferred_element_type=jnp.float32)


def _pack_blocks(block_rows, block_cols, w_data, in_features, out_features, tn):
    """Host-side packing of the static sparsity pattern (compressed, K-packed).

    Returns:
      w_packed : (n_out_tiles, k_max, KGROUP*32, tn) f32, pre-transposed slabs
      col_idx  : (n_out_tiles, k_max*KGROUP) i32, input block-column per x gather
      w_slot   : (n_out_tiles, k_max) i32, weight slab index (clamped padding)
      n_grp    : (n_out_tiles,) i32, number of real K slots per output tile
      k_max    : int, K grid extent
    """
    bs = BLOCK_SIZE
    g = KGROUP
    n_out_tiles = out_features // tn
    blocks_per_tile = tn // bs

    rows = np.asarray(block_rows, dtype=np.int64)
    cols = np.asarray(block_cols, dtype=np.int64)
    wd = np.asarray(w_data, dtype=np.float32)

    per_tile_cols = []
    for j in range(n_out_tiles):
        sel = (rows // blocks_per_tile) == j
        per_tile_cols.append(sorted(set(cols[sel].tolist())))
    n_grp = np.array([(len(c) + g - 1) // g for c in per_tile_cols],
                     dtype=np.int32)
    k_max = max(1, int(n_grp.max()))

    w_packed = np.zeros((n_out_tiles, k_max, g * bs, tn), np.float32)
    col_idx = np.zeros((n_out_tiles, k_max * g), np.int32)
    w_slot = np.zeros((n_out_tiles, k_max), np.int32)

    for j in range(n_out_tiles):
        cs = per_tile_cols[j]
        nc = len(cs)
        # x gather table; padding repeats the last real column so Pallas can
        # elide the repeated DMA (padded weight positions are zero anyway).
        for p in range(k_max * g):
            col_idx[j, p] = cs[min(p, nc - 1)] if nc > 0 else 0
        # weight slab table; padded slots repeat the last real slab (DMA
        # elided; compute skipped by the in-kernel guard).
        ng = max(int(n_grp[j]), 1)
        for s in range(k_max):
            w_slot[j, s] = min(s, ng - 1)
        # pack the (pre-transposed) blocks
        slot_of = {c: p for p, c in enumerate(cs)}
        for bidx in np.nonzero((rows // blocks_per_tile) == j)[0]:
            r = int(rows[bidx])
            c = int(cols[bidx])
            p = slot_of[c]
            s, t = divmod(p, g)
            r_local = r - j * blocks_per_tile
            w_packed[j, s, t * bs:(t + 1) * bs,
                     r_local * bs:(r_local + 1) * bs] = wd[bidx].T
    return w_packed, col_idx, w_slot, n_grp, k_max


def block_sparse_linear(x, w_data, block_rows, block_cols, bias,
                        in_features, out_features, *, tm=128, tn=128,
                        operand_dtype=jnp.bfloat16):
    """y = x @ W_dense.T + bias, W_dense built from 32x32 sparse blocks.

    tn: output tile width (128 fits every generation; 256 recommended on
        v6e/v7x when out_features and the grid's parallel extent allow it).
    tm: batch tile height (rounded to a multiple of 16; M is zero-padded).
    operand_dtype: MXU operand dtype (bf16 default, f32 accumulation).
    """
    M = x.shape[0]
    bs = BLOCK_SIZE
    assert x.ndim == 2 and x.shape[1] == in_features
    assert in_features % bs == 0 and out_features % bs == 0

    tn = min(tn, out_features)
    assert out_features % tn == 0 and (tn % 128 == 0 or tn == out_features)
    n_out_tiles = out_features // tn
    n_in_blocks = in_features // bs

    # Batch tile: multiple of 16 (bf16 sublane packing); pad M with zero rows.
    tm = max(16, min(tm, _round_up(M, 16)))
    tm = _round_up(tm, 16)
    Mp = _round_up(M, tm)

    # ---------- host-side packing of the static sparsity pattern ----------
    w_packed, col_idx, w_slot, n_grp, k_max = _pack_blocks(
        block_rows, block_cols, w_data, in_features, out_features, tn)

    x_f = jnp.asarray(x)
    if Mp != M:
        x_f = jnp.pad(x_f, ((0, Mp - M), (0, 0)))
    # Lane-dense per-block-column layout the BlockSpec gather can fetch:
    # xg[c, m, :] == x[m, c*32:(c+1)*32]; cast to the MXU operand dtype.
    xg = jnp.transpose(x_f.reshape(Mp, n_in_blocks, bs),
                       (1, 0, 2)).astype(operand_dtype)

    wq = jnp.asarray(w_packed, dtype=operand_dtype)

    if bias is None:
        bias_arr = jnp.zeros((1, out_features), jnp.float32)
    else:
        bias_arr = jnp.asarray(bias).reshape(1, out_features).astype(jnp.float32)

    op_bytes = jnp.dtype(operand_dtype).itemsize
    flops = int(2 * Mp * (KGROUP * bs) * tn * int(n_grp.sum()))
    bytes_accessed = int(Mp * in_features * op_bytes
                         + wq.size * op_bytes
                         + Mp * out_features * 4
                         + out_features * 4)

    grid = (Mp // tm, n_out_tiles, k_max)

    def _x_spec(t):
        def idx(i, j, k, cidx, wslot, ngrp, _t=t):
            return (cidx[j, k * KGROUP + _t], i, 0)
        return pl.BlockSpec((None, tm, bs), idx)

    w_spec = pl.BlockSpec(
        (None, None, KGROUP * bs, tn),
        lambda i, j, k, cidx, wslot, ngrp: (j, wslot[j, k], 0, 0))
    b_spec = pl.BlockSpec((1, tn), lambda i, j, k, cidx, wslot, ngrp: (0, j))
    o_spec = pl.BlockSpec((tm, tn), lambda i, j, k, cidx, wslot, ngrp: (i, j))

    out = pl.pallas_call(
        _bsl_kernel,
        out_shape=jax.ShapeDtypeStruct((Mp, out_features), jnp.float32),
        grid_spec=pltpu.PrefetchScalarGridSpec(
            num_scalar_prefetch=3,
            grid=grid,
            in_specs=[_x_spec(0), _x_spec(1), _x_spec(2), _x_spec(3),
                      w_spec, b_spec],
            out_specs=o_spec,
            scratch_shapes=[pltpu.VMEM((tm, KGROUP * bs), operand_dtype)],
        ),
        compiler_params=pltpu.CompilerParams(
            dimension_semantics=("parallel", "parallel", "arbitrary")),
        cost_estimate=pl.CostEstimate(
            flops=flops, transcendentals=0, bytes_accessed=bytes_accessed),
    )(jnp.asarray(col_idx), jnp.asarray(w_slot), jnp.asarray(n_grp),
      xg, xg, xg, xg, wq, bias_arr)

    if Mp != M:
        out = out[:M]
    if out.dtype != x.dtype:
        out = out.astype(x.dtype)
    return out


def build_block_sparse_weight(key, in_features, out_features, density):
    """Deterministic equivalent of BlockSparseMatrix.randn placement + values."""
    bs = BLOCK_SIZE
    assert in_features % bs == 0 and out_features % bs == 0
    n_row_blocks = out_features // bs
    n_col_blocks = in_features // bs
    total_blocks = n_row_blocks * n_col_blocks
    block_count = int(density * (in_features * out_features) / (bs * bs))

    k_pos, k_val = jax.random.split(key)
    flat = np.asarray(jax.random.permutation(k_pos, total_blocks))[:block_count]
    block_rows = (flat // n_col_blocks).astype(np.int32)
    block_cols = (flat % n_col_blocks).astype(np.int32)
    w_data = jax.random.normal(k_val, (block_count, bs, bs), dtype=jnp.float32)
    return w_data, block_rows, block_cols


def dense_from_blocks(w_data, block_rows, block_cols, out_features, in_features):
    bs = BLOCK_SIZE
    dense = np.zeros((out_features, in_features), dtype=np.float32)
    wd = np.asarray(w_data)
    for k, (r, c) in enumerate(zip(block_rows, block_cols)):
        dense[r * bs:(r + 1) * bs, c * bs:(c + 1) * bs] = wd[k]
    return jnp.asarray(dense)


if __name__ == "__main__":
    key = jax.random.PRNGKey(0)
    k_w, k_x = jax.random.split(key)

    batch = 128
    in_features = 256
    out_features = 256
    density = 0.5   # -> block_count = 32 of 64 possible 32x32 blocks

    w_data, block_rows, block_cols = build_block_sparse_weight(
        k_w, in_features, out_features, density)
    bias = jnp.zeros((out_features,), dtype=jnp.float32)   # module init: zeros
    x = jax.random.normal(k_x, (batch, in_features), dtype=jnp.float32)

    y = block_sparse_linear(x, w_data, block_rows, block_cols, bias,
                            in_features, out_features, tm=128, tn=128)
    y = jax.block_until_ready(y)

    # Reference: dense x @ W.T + bias with the same bf16 operand rounding the
    # kernel applies (kernel uses bf16 operands with f32 accumulation).
    w_dense = dense_from_blocks(w_data, block_rows, block_cols,
                                out_features, in_features)
    x_bf = x.astype(jnp.bfloat16).astype(jnp.float32)
    w_bf = w_dense.astype(jnp.bfloat16).astype(jnp.float32)
    y_ref = x_bf @ w_bf.T + bias
    np.testing.assert_allclose(np.asarray(y), np.asarray(y_ref),
                               rtol=2e-3, atol=2e-2)

    print("KERNEL_OK")
</pallas_src>

<mosaic_0001>
module attributes {stable_mosaic.version = 11 : i64} {
  func.func @_bsl_kernel(%arg0: i32, %arg1: i32, %arg2: i32, %arg3: memref<2x8xi32, #tpu.memory_space<smem>>, %arg4: memref<2x2xi32, #tpu.memory_space<smem>>, %arg5: memref<2xi32, #tpu.memory_space<smem>>, %arg6: memref<1x128x32xbf16, #tpu.memory_space<vmem>>, %arg7: memref<1x128x32xbf16, #tpu.memory_space<vmem>>, %arg8: memref<1x128x32xbf16, #tpu.memory_space<vmem>>, %arg9: memref<1x128x32xbf16, #tpu.memory_space<vmem>>, %arg10: memref<1x1x128x128xbf16, #tpu.memory_space<vmem>>, %arg11: memref<1x128xf32, #tpu.memory_space<vmem>>, %arg12: memref<128x128xf32, #tpu.memory_space<vmem>>, %arg13: memref<128x128xbf16, #tpu.memory_space<vmem>>) attributes {dimension_semantics = [#tpu.dimension_semantics<parallel>, #tpu.dimension_semantics<parallel>, #tpu.dimension_semantics<arbitrary>], iteration_bounds = array<i64: 1, 2, 2>, scalar_prefetch = 3 : i64, scratch_operands = 1 : i64, tpu.core_type = #tpu.core_type<tc>, window_params = [{transform_indices = @transform_0, window_bounds = array<i64: 1, 128, 32>}, {transform_indices = @transform_1, window_bounds = array<i64: 1, 128, 32>}, {transform_indices = @transform_2, window_bounds = array<i64: 1, 128, 32>}, {transform_indices = @transform_3, window_bounds = array<i64: 1, 128, 32>}, {transform_indices = @transform_4, window_bounds = array<i64: 1, 1, 128, 128>}, {transform_indices = @transform_5, window_bounds = array<i64: 1, 128>}, {transform_indices = @transform_6, window_bounds = array<i64: 128, 128>}]} {
    %c0_i32 = arith.constant 0 : i32
    %0 = arith.cmpi eq, %arg2, %c0_i32 : i32
    %1 = arith.extui %0 : i1 to i32
    %c0_i32_0 = arith.constant 0 : i32
    %2 = arith.cmpi ne, %1, %c0_i32_0 : i32
    scf.if %2 {
      %c0 = arith.constant 0 : index
      %c0_2 = arith.constant 0 : index
      %8 = vector.load %arg11[%c0, %c0_2] : memref<1x128xf32, #tpu.memory_space<vmem>>, vector<1x128xf32>
      %9 = vector.shape_cast %8 : vector<1x128xf32> to vector<1x128xf32>
      %10 = vector.broadcast %9 : vector<1x128xf32> to vector<128x128xf32>
      %c0_3 = arith.constant 0 : index
      %c0_4 = arith.constant 0 : index
      %11 = vector.load %arg12[%c0_3, %c0_4] : memref<128x128xf32, #tpu.memory_space<vmem>>, vector<128x128xf32>
      tpu.vector_store %arg12[%c0_3, %c0_4], %10 {strides = array<i32>} : memref<128x128xf32, #tpu.memory_space<vmem>>, vector<128x128xf32>,
    } else {
    }
    %3 = arith.index_cast %arg1 : i32 to index
    %4 = memref.load %arg5[%3] : memref<2xi32, #tpu.memory_space<smem>>
    %5 = arith.cmpi slt, %arg2, %4 : i32
    %6 = arith.extui %5 : i1 to i32
    %c0_i32_1 = arith.constant 0 : i32
    %7 = arith.cmpi ne, %6, %c0_i32_1 : i32
    scf.if %7 {
      %c0 = arith.constant 0 : index
      %c0_2 = arith.constant 0 : index
      %c0_3 = arith.constant 0 : index
      %8 = vector.load %arg6[%c0, %c0_2, %c0_3] : memref<1x128x32xbf16, #tpu.memory_space<vmem>>, vector<1x128x32xbf16>
      %9 = vector.shape_cast %8 : vector<1x128x32xbf16> to vector<128x32xbf16>
      %c0_4 = arith.constant 0 : index
      %c0_5 = arith.constant 0 : index
      %10 = vector.load %arg13[%c0_4, %c0_5] : memref<128x128xbf16, #tpu.memory_space<vmem>>, vector<128x32xbf16>
      tpu.vector_store %arg13[%c0_4, %c0_5], %9 {strides = array<i32>} : memref<128x128xbf16, #tpu.memory_space<vmem>>, vector<128x32xbf16>,
      %c0_6 = arith.constant 0 : index
      %c0_7 = arith.constant 0 : index
      %c0_8 = arith.constant 0 : index
      %11 = vector.load %arg7[%c0_6, %c0_7, %c0_8] : memref<1x128x32xbf16, #tpu.memory_space<vmem>>, vector<1x128x32xbf16>
      %12 = vector.shape_cast %11 : vector<1x128x32xbf16> to vector<128x32xbf16>
      %c0_9 = arith.constant 0 : index
      %c32 = arith.constant 32 : index
      %13 = vector.load %arg13[%c0_9, %c32] : memref<128x128xbf16, #tpu.memory_space<vmem>>, vector<128x32xbf16>
      tpu.vector_store %arg13[%c0_9, %c32], %12 {strides = array<i32>} : memref<128x128xbf16, #tpu.memory_space<vmem>>, vector<128x32xbf16>,
      %c0_10 = arith.constant 0 : index
      %c0_11 = arith.constant 0 : index
      %c0_12 = arith.constant 0 : index
      %14 = vector.load %arg8[%c0_10, %c0_11, %c0_12] : memref<1x128x32xbf16, #tpu.memory_space<vmem>>, vector<1x128x32xbf16>
      %15 = vector.shape_cast %14 : vector<1x128x32xbf16> to vector<128x32xbf16>
      %c0_13 = arith.constant 0 : index
      %c64 = arith.constant 64 : index
      %16 = vector.load %arg13[%c0_13, %c64] : memref<128x128xbf16, #tpu.memory_space<vmem>>, vector<128x32xbf16>
      tpu.vector_store %arg13[%c0_13, %c64], %15 {strides = array<i32>} : memref<128x128xbf16, #tpu.memory_space<vmem>>, vector<128x32xbf16>,
      %c0_14 = arith.constant 0 : index
      %c0_15 = arith.constant 0 : index
      %c0_16 = arith.constant 0 : index
      %17 = vector.load %arg9[%c0_14, %c0_15, %c0_16] : memref<1x128x32xbf16, #tpu.memory_space<vmem>>, vector<1x128x32xbf16>
      %18 = vector.shape_cast %17 : vector<1x128x32xbf16> to vector<128x32xbf16>
      %c0_17 = arith.constant 0 : index
      %c96 = arith.constant 96 : index
      %19 = vector.load %arg13[%c0_17, %c96] : memref<128x128xbf16, #tpu.memory_space<vmem>>, vector<128x32xbf16>
      tpu.vector_store %arg13[%c0_17, %c96], %18 {strides = array<i32>} : memref<128x128xbf16, #tpu.memory_space<vmem>>, vector<128x32xbf16>,
      %c0_18 = arith.constant 0 : index
      %c0_19 = arith.constant 0 : index
      %20 = vector.load %arg12[%c0_18, %c0_19] : memref<128x128xf32, #tpu.memory_space<vmem>>, vector<128x128xf32>
      %c0_20 = arith.constant 0 : index
      %c0_21 = arith.constant 0 : index
      %21 = vector.load %arg13[%c0_20, %c0_21] : memref<128x128xbf16, #tpu.memory_space<vmem>>, vector<128x128xbf16>
      %c0_22 = arith.constant 0 : index
      %c0_23 = arith.constant 0 : index
      %c0_24 = arith.constant 0 : index
      %c0_25 = arith.constant 0 : index
      %22 = vector.load %arg10[%c0_22, %c0_23, %c0_24, %c0_25] : memref<1x1x128x128xbf16, #tpu.memory_space<vmem>>, vector<1x1x128x128xbf16>
      %23 = vector.shape_cast %22 : vector<1x1x128x128xbf16> to vector<128x128xbf16>
      %cst = arith.constant dense<0.000000e+00> : vector<128x128xf32>
      %24 = tpu.matmul %21, %23, %cst {dimension_numbers = #tpu.dot_dimension_numbers<[1], [0], [0], [1], [0, 0, 1, 1], [], []>} : vector<128x128xbf16>, vector<128x128xbf16>, vector<128x128xf32> -> vector<128x128xf32>
      %25 = arith.addf %20, %24 : vector<128x128xf32>
      %c0_26 = arith.constant 0 : index
      %c0_27 = arith.constant 0 : index
      %26 = vector.load %arg12[%c0_26, %c0_27] : memref<128x128xf32, #tpu.memory_space<vmem>>, vector<128x128xf32>
      tpu.vector_store %arg12[%c0_26, %c0_27], %25 {strides = array<i32>} : memref<128x128xf32, #tpu.memory_space<vmem>>, vector<128x128xf32>,
    } else {
    }
    return
  }
  func.func @transform_0(%arg0: i32, %arg1: i32, %arg2: i32, %arg3: memref<2x8xi32, #tpu.memory_space<smem>>, %arg4: memref<2x2xi32, #tpu.memory_space<smem>>, %arg5: memref<2xi32, #tpu.memory_space<smem>>) -> (i32, i32, i32) {
    %c4_i32 = arith.constant 4 : i32
    %0 = arith.muli %arg2, %c4_i32 : i32
    %c0_i32 = arith.constant 0 : i32
    %1 = arith.addi %0, %c0_i32 : i32
    %2 = arith.index_cast %arg1 : i32 to index
    %3 = arith.index_cast %1 : i32 to index
    %4 = memref.load %arg3[%2, %3] : memref<2x8xi32, #tpu.memory_space<smem>>
    %c0_i32_0 = arith.constant 0 : i32
    %c0_i32_1 = arith.constant 0 : i32
    return %4, %arg0, %c0_i32_0 : i32, i32, i32
  }
  func.func @transform_1(%arg0: i32, %arg1: i32, %arg2: i32, %arg3: memref<2x8xi32, #tpu.memory_space<smem>>, %arg4: memref<2x2xi32, #tpu.memory_space<smem>>, %arg5: memref<2xi32, #tpu.memory_space<smem>>) -> (i32, i32, i32) {
    %c4_i32 = arith.constant 4 : i32
    %0 = arith.muli %arg2, %c4_i32 : i32
    %c1_i32 = arith.constant 1 : i32
    %1 = arith.addi %0, %c1_i32 : i32
    %2 = arith.index_cast %arg1 : i32 to index
    %3 = arith.index_cast %1 : i32 to index
    %4 = memref.load %arg3[%2, %3] : memref<2x8xi32, #tpu.memory_space<smem>>
    %c0_i32 = arith.constant 0 : i32
    %c0_i32_0 = arith.constant 0 : i32
    return %4, %arg0, %c0_i32 : i32, i32, i32
  }
  func.func @transform_2(%arg0: i32, %arg1: i32, %arg2: i32, %arg3: memref<2x8xi32, #tpu.memory_space<smem>>, %arg4: memref<2x2xi32, #tpu.memory_space<smem>>, %arg5: memref<2xi32, #tpu.memory_space<smem>>) -> (i32, i32, i32) {
    %c4_i32 = arith.constant 4 : i32
    %0 = arith.muli %arg2, %c4_i32 : i32
    %c2_i32 = arith.constant 2 : i32
    %1 = arith.addi %0, %c2_i32 : i32
    %2 = arith.index_cast %arg1 : i32 to index
    %3 = arith.index_cast %1 : i32 to index
    %4 = memref.load %arg3[%2, %3] : memref<2x8xi32, #tpu.memory_space<smem>>
    %c0_i32 = arith.constant 0 : i32
    %c0_i32_0 = arith.constant 0 : i32
    return %4, %arg0, %c0_i32 : i32, i32, i32
  }
  func.func @transform_3(%arg0: i32, %arg1: i32, %arg2: i32, %arg3: memref<2x8xi32, #tpu.memory_space<smem>>, %arg4: memref<2x2xi32, #tpu.memory_space<smem>>, %arg5: memref<2xi32, #tpu.memory_space<smem>>) -> (i32, i32, i32) {
    %c4_i32 = arith.constant 4 : i32
    %0 = arith.muli %arg2, %c4_i32 : i32
    %c3_i32 = arith.constant 3 : i32
    %1 = arith.addi %0, %c3_i32 : i32
    %2 = arith.index_cast %arg1 : i32 to index
    %3 = arith.index_cast %1 : i32 to index
    %4 = memref.load %arg3[%2, %3] : memref<2x8xi32, #tpu.memory_space<smem>>
    %c0_i32 = arith.constant 0 : i32
    %c0_i32_0 = arith.constant 0 : i32
    return %4, %arg0, %c0_i32 : i32, i32, i32
  }
  func.func @transform_4(%arg0: i32, %arg1: i32, %arg2: i32, %arg3: memref<2x8xi32, #tpu.memory_space<smem>>, %arg4: memref<2x2xi32, #tpu.memory_space<smem>>, %arg5: memref<2xi32, #tpu.memory_space<smem>>) -> (i32, i32, i32, i32) {
    %0 = arith.index_cast %arg1 : i32 to index
    %1 = arith.index_cast %arg2 : i32 to index
    %2 = memref.load %arg4[%0, %1] : memref<2x2xi32, #tpu.memory_space<smem>>
    %c0_i32 = arith.constant 0 : i32
    %c0_i32_0 = arith.constant 0 : i32
    %c0_i32_1 = arith.constant 0 : i32
    return %arg1, %2, %c0_i32, %c0_i32_0 : i32, i32, i32, i32
  }
  func.func @transform_5(%arg0: i32, %arg1: i32, %arg2: i32, %arg3: memref<2x8xi32, #tpu.memory_space<smem>>, %arg4: memref<2x2xi32, #tpu.memory_space<smem>>, %arg5: memref<2xi32, #tpu.memory_space<smem>>) -> (i32, i32) {
    %c0_i32 = arith.constant 0 : i32
    %c0_i32_0 = arith.constant 0 : i32
    return %c0_i32, %arg1 : i32, i32
  }
  func.func @transform_6(%arg0: i32, %arg1: i32, %arg2: i32, %arg3: memref<2x8xi32, #tpu.memory_space<smem>>, %arg4: memref<2x2xi32, #tpu.memory_space<smem>>, %arg5: memref<2xi32, #tpu.memory_space<smem>>) -> (i32, i32) {
    %c0_i32 = arith.constant 0 : i32
    return %arg0, %arg1 : i32, i32
  }
}

</mosaic_0001>

<llo_original>
// kernel: tpu_custom_call.1
$region0: #{tpu_custom_call.1}
  #allocation0 [shape = 'u32[]', space=smem, size = 0x4, offset = 0x4, fixed_abs, tag = 'smem constant byte address 0x4 - core index']
  #allocation1 [shape = 'u32[144,128]{1,0:T(1,128)}', space=vmem, size = 0x12000, scoped, tag = 'internal scratch']
  #allocation2 [shape = 'bf16[128,128]{1,0:T(8,128)(2,1)}', space=vmem, size = 0x8000, scoped, tag = 'scratch operand']
  #allocation3 [shape = 's32[1]{0}', space=sflag, size = 0x4, scoped, tag = 'scoped memory for tpu_custom_call.1']
  #allocation4 [shape = 'u8[1024]{0}', space=smem, size = 0x400, scoped, tag = 'prefetched SMEM operand 0']
  #allocation5 [shape = 'u8[1024]{0}', space=smem, size = 0x400, scoped, tag = 'prefetched SMEM operand 1']
  #allocation6 [shape = 'u8[512]{0}', space=smem, size = 0x200, scoped, tag = 'prefetched SMEM operand 2']
  %s0 = inlined_call_operand.vmem [shape: s32[2,8], index: 0, kind: input, shape index: {}]
  %s1 = inlined_call_operand.vmem [shape: s32[2,2], index: 1, kind: input, shape index: {}]
  %s2 = inlined_call_operand.vmem [shape: s32[2], index: 2, kind: input, shape index: {}]
  %s3 = inlined_call_operand.vmem [shape: bf16[8,128,32], index: 3, kind: input, shape index: {}]
  %s4 = inlined_call_operand.vmem [shape: bf16[8,128,32], index: 4, kind: input, shape index: {}]
  %s5 = inlined_call_operand.vmem [shape: bf16[8,128,32], index: 5, kind: input, shape index: {}]
  %s6 = inlined_call_operand.vmem [shape: bf16[8,128,32], index: 6, kind: input, shape index: {}]
  %s7 = inlined_call_operand.vmem [shape: bf16[2,2,128,128], index: 7, kind: input, shape index: {}]
  %s8 = inlined_call_operand.vmem [shape: f32[1,256], index: 8, kind: input, shape index: {}]
  %s9 = inlined_call_operand.hbm [shape: f32[128,256], index: 9, kind: output, shape index: {}]
  %s10 = sld [smem:[#allocation0]]
  $region65: #{tpu_custom_call.1} parent=0
    _
  %s12 = ssub.s32 1, %s10
  %s13 = scalar_select 0, %s12, %s10
  %s14 = sshll.u32 %s0, 4
  %s15 = int_to_ptr.vmem [resolvable:$true] %s14
  %17 = dma.vmem_to_smem %s15, 32, [#allocation4], [#allocation3]
  %s18 = sshll.u32 %s1, 4
  %s19 = int_to_ptr.vmem [resolvable:$true] %s18
  %21 = dma.vmem_to_smem %s19, 32, [#allocation5], [#allocation3]
  %s22 = sshll.u32 %s2, 4
  %s23 = int_to_ptr.vmem [resolvable:$true] %s22
  %25 = dma.vmem_to_smem %s23, 16, [#allocation6], [#allocation3]
  %26 = dma.done [#allocation3], 80
  %27 = sfence
  $region1: #{tpu_custom_call.1} parent=0
    #allocation7 [shape = 'u8[131072]{0}', space=vmem, size = 0x20000, scoped, tag = 'output window, operand 0']
    #allocation8 [shape = 's32[2]{0}', space=sflag, size = 0x8, scoped, tag = 'scoped memory for tpu_custom_call.1']
    %28 = vsyncpa [#allocation8], 0
    %s29 = scalar_lea.sflag [#allocation8], 1
    %30 = vsyncpa %s29, 0
    loop: start=0, step=1, limit=6
    $region2: #{tpu_custom_call.1} parent=1 // loop_pre_header
      _
    $region3: #{tpu_custom_call.1} parent=1 // loop_header
      %s32 = sphi 0, %s36
      %p33 = scmp.ge.s32.totalorder %s32, 6
      %s39 = sphi 0, %s58
      %s40 = sphi 0, %s54
      %s41 = sphi 0, %s50
      %s42 = sphi 0, %s39
      %s43 = sphi 0, %s40
      %s44 = sphi 0, %s41
      %s45 = sphi 0, %s42
      %s46 = sphi 0, %s43
      %s47 = sphi 0, %s44
      %s81 = sphi 0, %s83
      %s84 = sphi 0, %s81
      %s85 = sphi 0, %s84
      %s101 = sphi 0, %s85
      %s129 = sphi 0, %s131
      %s132 = sphi 0, %s129
      %s133 = sphi 0, %s132
      %s149 = sphi 0, %s133
      %s177 = sphi 0, %s179
      %s180 = sphi 0, %s177
      %s181 = sphi 0, %s180
      %s197 = sphi 0, %s181
      %s225 = sphi 0, %s227
      %s228 = sphi 0, %s225
      %s229 = sphi 0, %s228
      %s245 = sphi 0, %s229
      %s269 = sphi 0, %s271
      %s272 = sphi 0, %s269
      %s273 = sphi 0, %s272
      %s289 = sphi 0, %s273
      %s295 = sphi 0, %s297
      %s298 = sphi 0, %s295
      %s299 = sphi 0, %s298
      %s315 = sphi 0, %s299
      %s323 = sphi 0, %s325
      %s326 = sphi 0, %s323
      %s327 = sphi 0, %s326
      %s343 = sphi 0, %s327
    $region4: #{tpu_custom_call.1} parent=1 // loop_header_branch
      %35 = sbr.rel (%p33) target = $region8
    $region5: #{tpu_custom_call.1} parent=1 // loop_body
      %s37 = ssub.s32 %s32, 1
      %s38 = ssub.s32 %s32, 2
      %s48 = sadd.s32 1, %s41
      %p49 = scmp.ge.s32.totalorder %s48, 2
      %s50 = scalar_select %p49, 0, %s48
      %s51 = sadd.s32 1, %s40
      %s52 = scalar_select %p49, %s51, %s40
      %p53 = scmp.ge.s32.totalorder %s52, 2
      %s54 = scalar_select %p53, 0, %s52
      %s55 = sadd.s32 1, %s39
      %s56 = scalar_select %p53, %s55, %s39
      %p57 = scmp.ge.s32.totalorder %s56, 1
      %s58 = scalar_select %p57, 0, %s56
      %s59 = smul.u32 %s41, 4
      %s60 = sshra.s32 %s59, 7
      %s61 = sand.u32 %s59, 127
      %s62 = sadd.s32 %s60, %s40
      %s63 = smul.u32 %s62, 128
      %s64 = sshra.s32 %s59, 7
      %s65 = sand.u32 %s59, 127
      %s66 = sadd.s32 %s63, %s65
      %s67 = sld [smem:[#allocation4 + %s66]]
      %s68 = smul.u32 %s50, 4
      %s69 = sshra.s32 %s68, 7
      %s70 = sand.u32 %s68, 127
      %s71 = sadd.s32 %s69, %s54
      %s72 = smul.u32 %s71, 128
      %s73 = sshra.s32 %s68, 7
      %s74 = sand.u32 %s68, 127
      %s75 = sadd.s32 %s72, %s74
      %s76 = sld [smem:[#allocation4 + %s75]]
      %s77 = ssub.s32 %s67, %s76
      %s78 = ssub.s32 %s39, %s58
      %s79 = sor.u32 %s77, %s78
      %p80 = scmp.eq.s32.totalorder %s79, 0
      %s82 = sadd.s32 %s81, 1
      %s83 = scalar_select %p80, %s81, %s82
      %p86 = pneg %p80
      %p87 = scmp.eq.s32.totalorder %s32, 3
      %p88 = por %p86, %p87
      %p89 = scmp.ne.s32.totalorder %s81, %s84
      %p90 = scmp.eq.s32.totalorder %s32, 0
      %p91 = por %p89, %p90
      %p92 = scmp.ne.s32.totalorder %s81, %s84
      %p93 = scmp.eq.s32.totalorder %s37, 3
      %p94 = por %p92, %p93
      %p95 = scmp.ne.s32.totalorder %s84, %s85
      %p96 = scmp.eq.s32.totalorder %s37, 0
      %p97 = por %p95, %p96
      %p98 = scmp.ne.s32.totalorder %s84, %s85
      %p99 = scmp.eq.s32.totalorder %s38, 3
      %p100 = por %p98, %p99
      %p102 = scmp.ne.s32.totalorder %s85, %s101
      %p103 = scmp.eq.s32.totalorder %s38, 0
      %p104 = por %p102, %p103
      %s105 = smul.u32 %s41, 4
      %s106 = sadd.s32 %s105, 1
      %s107 = sshra.s32 %s106, 7
      %s108 = sand.u32 %s106, 127
      %s109 = sadd.s32 %s107, %s40
      %s110 = smul.u32 %s109, 128
      %s111 = sshra.s32 %s106, 7
      %s112 = sand.u32 %s106, 127
      %s113 = sadd.s32 %s110, %s112
      %s114 = sld [smem:[#allocation4 + %s113]]
      %s115 = smul.u32 %s50, 4
      %s116 = sadd.s32 %s115, 1
      %s117 = sshra.s32 %s116, 7
      %s118 = sand.u32 %s116, 127
      %s119 = sadd.s32 %s117, %s54
      %s120 = smul.u32 %s119, 128
      %s121 = sshra.s32 %s116, 7
      %s122 = sand.u32 %s116, 127
      %s123 = sadd.s32 %s120, %s122
      %s124 = sld [smem:[#allocation4 + %s123]]
      %s125 = ssub.s32 %s114, %s124
      %s126 = ssub.s32 %s39, %s58
      %s127 = sor.u32 %s125, %s126
      %p128 = scmp.eq.s32.totalorder %s127, 0
      %s130 = sadd.s32 %s129, 1
      %s131 = scalar_select %p128, %s129, %s130
      %p134 = pneg %p128
      %p135 = scmp.eq.s32.totalorder %s32, 3
      %p136 = por %p134, %p135
      %p137 = scmp.ne.s32.totalorder %s129, %s132
      %p138 = scmp.eq.s32.totalorder %s32, 0
      %p139 = por %p137, %p138
      %p140 = scmp.ne.s32.totalorder %s129, %s132
      %p141 = scmp.eq.s32.totalorder %s37, 3
      %p142 = por %p140, %p141
      %p143 = scmp.ne.s32.totalorder %s132, %s133
      %p144 = scmp.eq.s32.totalorder %s37, 0
      %p145 = por %p143, %p144
      %p146 = scmp.ne.s32.totalorder %s132, %s133
      %p147 = scmp.eq.s32.totalorder %s38, 3
      %p148 = por %p146, %p147
      %p150 = scmp.ne.s32.totalorder %s133, %s149
      %p151 = scmp.eq.s32.totalorder %s38, 0
      %p152 = por %p150, %p151
      %s153 = smul.u32 %s41, 4
      %s154 = sadd.s32 %s153, 2
      %s155 = sshra.s32 %s154, 7
      %s156 = sand.u32 %s154, 127
      %s157 = sadd.s32 %s155, %s40
      %s158 = smul.u32 %s157, 128
      %s159 = sshra.s32 %s154, 7
      %s160 = sand.u32 %s154, 127
      %s161 = sadd.s32 %s158, %s160
      %s162 = sld [smem:[#allocation4 + %s161]]
      %s163 = smul.u32 %s50, 4
      %s164 = sadd.s32 %s163, 2
      %s165 = sshra.s32 %s164, 7
      %s166 = sand.u32 %s164, 127
      %s167 = sadd.s32 %s165, %s54
      %s168 = smul.u32 %s167, 128
      %s169 = sshra.s32 %s164, 7
      %s170 = sand.u32 %s164, 127
      %s171 = sadd.s32 %s168, %s170
      %s172 = sld [smem:[#allocation4 + %s171]]
      %s173 = ssub.s32 %s162, %s172
      %s174 = ssub.s32 %s39, %s58
      %s175 = sor.u32 %s173, %s174
      %p176 = scmp.eq.s32.totalorder %s175, 0
      %s178 = sadd.s32 %s177, 1
      %s179 = scalar_select %p176, %s177, %s178
      %p182 = pneg %p176
      %p183 = scmp.eq.s32.totalorder %s32, 3
      %p184 = por %p182, %p183
      %p185 = scmp.ne.s32.totalorder %s177, %s180
      %p186 = scmp.eq.s32.totalorder %s32, 0
      %p187 = por %p185, %p186
      %p188 = scmp.ne.s32.totalorder %s177, %s180
      %p189 = scmp.eq.s32.totalorder %s37, 3
      %p190 = por %p188, %p189
      %p191 = scmp.ne.s32.totalorder %s180, %s181
      %p192 = scmp.eq.s32.totalorder %s37, 0
      %p193 = por %p191, %p192
      %p194 = scmp.ne.s32.totalorder %s180, %s181
      %p195 = scmp.eq.s32.totalorder %s38, 3
      %p196 = por %p194, %p195
      %p198 = scmp.ne.s32.totalorder %s181, %s197
      %p199 = scmp.eq.s32.totalorder %s38, 0
      %p200 = por %p198, %p199
      %s201 = smul.u32 %s41, 4
      %s202 = sadd.s32 %s201, 3
      %s203 = sshra.s32 %s202, 7
      %s204 = sand.u32 %s202, 127
      %s205 = sadd.s32 %s203, %s40
      %s206 = smul.u32 %s205, 128
      %s207 = sshra.s32 %s202, 7
      %s208 = sand.u32 %s202, 127
      %s209 = sadd.s32 %s206, %s208
      %s210 = sld [smem:[#allocation4 + %s209]]
      %s211 = smul.u32 %s50, 4
      %s212 = sadd.s32 %s211, 3
      %s213 = sshra.s32 %s212, 7
      %s214 = sand.u32 %s212, 127
      %s215 = sadd.s32 %s213, %s54
      %s216 = smul.u32 %s215, 128
      %s217 = sshra.s32 %s212, 7
      %s218 = sand.u32 %s212, 127
      %s219 = sadd.s32 %s216, %s218
      %s220 = sld [smem:[#allocation4 + %s219]]
      %s221 = ssub.s32 %s210, %s220
      %s222 = ssub.s32 %s39, %s58
      %s223 = sor.u32 %s221, %s222
      %p224 = scmp.eq.s32.totalorder %s223, 0
      %s226 = sadd.s32 %s225, 1
      %s227 = scalar_select %p224, %s225, %s226
      %p230 = pneg %p224
      %p231 = scmp.eq.s32.totalorder %s32, 3
      %p232 = por %p230, %p231
      %p233 = scmp.ne.s32.totalorder %s225, %s228
      %p234 = scmp.eq.s32.totalorder %s32, 0
      %p235 = por %p233, %p234
      %p236 = scmp.ne.s32.totalorder %s225, %s228
      %p237 = scmp.eq.s32.totalorder %s37, 3
      %p238 = por %p236, %p237
      %p239 = scmp.ne.s32.totalorder %s228, %s229
      %p240 = scmp.eq.s32.totalorder %s37, 0
      %p241 = por %p239, %p240
      %p242 = scmp.ne.s32.totalorder %s228, %s229
      %p243 = scmp.eq.s32.totalorder %s38, 3
      %p244 = por %p242, %p243
      %p246 = scmp.ne.s32.totalorder %s229, %s245
      %p247 = scmp.eq.s32.totalorder %s38, 0
      %p248 = por %p246, %p247
      %s249 = sshra.s32 %s41, 7
      %s250 = sand.u32 %s41, 127
      %s251 = sadd.s32 %s249, %s40
      %s252 = smul.u32 %s251, 128
      %s253 = sshra.s32 %s41, 7
      %s254 = sand.u32 %s41, 127
      %s255 = sadd.s32 %s252, %s254
      %s256 = sld [smem:[#allocation5 + %s255]]
      %s257 = sshra.s32 %s50, 7
      %s258 = sand.u32 %s50, 127
      %s259 = sadd.s32 %s257, %s54
      %s260 = smul.u32 %s259, 128
      %s261 = sshra.s32 %s50, 7
      %s262 = sand.u32 %s50, 127
      %s263 = sadd.s32 %s260, %s262
      %s264 = sld [smem:[#allocation5 + %s263]]
      %s265 = ssub.s32 %s40, %s54
      %s266 = ssub.s32 %s256, %s264
      %s267 = sor.u32 %s265, %s266
      %p268 = scmp.eq.s32.totalorder %s267, 0
      %s270 = sadd.s32 %s269, 1
      %s271 = scalar_select %p268, %s269, %s270
      %p274 = pneg %p268
      %p275 = scmp.eq.s32.totalorder %s32, 3
      %p276 = por %p274, %p275
      %p277 = scmp.ne.s32.totalorder %s269, %s272
      %p278 = scmp.eq.s32.totalorder %s32, 0
      %p279 = por %p277, %p278
      %p280 = scmp.ne.s32.totalorder %s269, %s272
      %p281 = scmp.eq.s32.totalorder %s37, 3
      %p282 = por %p280, %p281
      %p283 = scmp.ne.s32.totalorder %s272, %s273
      %p284 = scmp.eq.s32.totalorder %s37, 0
      %p285 = por %p283, %p284
      %p286 = scmp.ne.s32.totalorder %s272, %s273
      %p287 = scmp.eq.s32.totalorder %s38, 3
      %p288 = por %p286, %p287
      %p290 = scmp.ne.s32.totalorder %s273, %s289
      %p291 = scmp.eq.s32.totalorder %s38, 0
      %p292 = por %p290, %p291
      %s293 = ssub.s32 %s40, %s54
      %p294 = scmp.eq.s32.totalorder %s293, 0
      %s296 = sadd.s32 %s295, 1
      %s297 = scalar_select %p294, %s295, %s296
      %p300 = pneg %p294
      %p301 = scmp.eq.s32.totalorder %s32, 3
      %p302 = por %p300, %p301
      %p303 = scmp.ne.s32.totalorder %s295, %s298
      %p304 = scmp.eq.s32.totalorder %s32, 0
      %p305 = por %p303, %p304
      %p306 = scmp.ne.s32.totalorder %s295, %s298
      %p307 = scmp.eq.s32.totalorder %s37, 3
      %p308 = por %p306, %p307
      %p309 = scmp.ne.s32.totalorder %s298, %s299
      %p310 = scmp.eq.s32.totalorder %s37, 0
      %p311 = por %p309, %p310
      %p312 = scmp.ne.s32.totalorder %s298, %s299
      %p313 = scmp.eq.s32.totalorder %s38, 3
      %p314 = por %p312, %p313
      %p316 = scmp.ne.s32.totalorder %s299, %s315
      %p317 = scmp.eq.s32.totalorder %s38, 0
      %p318 = por %p316, %p317
      %s319 = ssub.s32 %s39, %s58
      %s320 = ssub.s32 %s40, %s54
      %s321 = sor.u32 %s319, %s320
      %p322 = scmp.eq.s32.totalorder %s321, 0
      %s324 = sadd.s32 %s323, 1
      %s325 = scalar_select %p322, %s323, %s324
      %p328 = pneg %p322
      %p329 = scmp.eq.s32.totalorder %s32, 3
      %p330 = por %p328, %p329
      %p331 = scmp.ne.s32.totalorder %s323, %s326
      %p332 = scmp.eq.s32.totalorder %s32, 0
      %p333 = por %p331, %p332
      %p334 = scmp.ne.s32.totalorder %s323, %s326
      %p335 = scmp.eq.s32.totalorder %s37, 3
      %p336 = por %p334, %p335
      %p337 = scmp.ne.s32.totalorder %s326, %s327
      %p338 = scmp.eq.s32.totalorder %s37, 0
      %p339 = por %p337, %p338
      %p340 = scmp.ne.s32.totalorder %s326, %s327
      %p341 = scmp.eq.s32.totalorder %s38, 3
      %p342 = por %p340, %p341
      %p344 = scmp.ne.s32.totalorder %s327, %s343
      %p345 = scmp.eq.s32.totalorder %s38, 0
      %p346 = por %p344, %p345
      %p347 = scmp.le.s32.totalorder 1, %s32
      %p348 = scmp.lt.s32.totalorder %s32, 5
      %p349 = pnand %p347, %p348
      %p350 = pneg %p349
      // Predicated region
      $region9: #{tpu_custom_call.1} parent=5 // pred_check
        _
      $region10: #{tpu_custom_call.1} parent=5 // pred_check_branch
        %352 = sbr.rel (%p349) target = $region12
      $region11: #{tpu_custom_call.1} parent=5 // pred_region
        %s353 = ssub.s32 %s32, 1
      $region12: #{tpu_custom_call.1} parent=5 // pred_fallthru
        _
      %p354 = scmp.lt.s32.totalorder %s32, 4
      // Predicated region
      $region13: #{tpu_custom_call.1} parent=5 // pred_check
        %p355 = pneg %p354
      $region14: #{tpu_custom_call.1} parent=5 // pred_check_branch
        %357 = sbr.rel (%p355) target = $region16
      $region15: #{tpu_custom_call.1} parent=5 // pred_region
        // Predicated region
        $region17: #{tpu_custom_call.1} parent=15 // pred_check
          %p358 = pneg %p91
        $region18: #{tpu_custom_call.1} parent=15 // pred_check_branch
          %360 = sbr.rel (%p358) target = $region20
        $region19: #{tpu_custom_call.1} parent=15 // pred_region
          %s361 = smul.u32 %s41, 4
          %s362 = sshra.s32 %s361, 7
          %s363 = sand.u32 %s361, 127
          %s364 = sadd.s32 %s362, %s40
          %s365 = smul.u32 %s364, 128
          %s366 = sshra.s32 %s361, 7
          %s367 = sand.u32 %s361, 127
          %s368 = sadd.s32 %s365, %s367
          %s369 = sld [smem:[#allocation4 + %s368]]
          %s370 = smul.u32 16, %s39
          %p371 = scmp.lt.s32.totalorder %s369, 7
          %s372 = scalar_select %p371, %s369, 7
          %p373 = scmp.lt.s32.totalorder %s370, 15
          %s374 = scalar_select %p373, %s370, 15
          %s375 = smul.addr %s372, 16
          %s376 = sadd.s32 %s374, %s375
          %s377 = smul.addr %s376, 4
          %s378 = scalar_lea.vmem %s3, %s377
          %s379 = smul.u32 %s41, 4
          %s380 = sshra.s32 %s379, 7
          %s381 = sand.u32 %s379, 127
          %s382 = sadd.s32 %s380, %s40
          %s383 = smul.u32 %s382, 128
          %s384 = sshra.s32 %s379, 7
          %s385 = sand.u32 %s379, 127
          %s386 = sadd.s32 %s383, %s385
          %s387 = sld [smem:[#allocation4 + %s386]]
          %s388 = smul.u32 16, %s39
        $region20: #{tpu_custom_call.1} parent=15 // pred_fallthru
          _
        // Predicated region
        $region21: #{tpu_custom_call.1} parent=15 // pred_check
          %p389 = pneg %p139
        $region22: #{tpu_custom_call.1} parent=15 // pred_check_branch
          %391 = sbr.rel (%p389) target = $region24
        $region23: #{tpu_custom_call.1} parent=15 // pred_region
          %s392 = smul.u32 %s41, 4
          %s393 = sadd.s32 %s392, 1
          %s394 = sshra.s32 %s393, 7
          %s395 = sand.u32 %s393, 127
          %s396 = sadd.s32 %s394, %s40
          %s397 = smul.u32 %s396, 128
          %s398 = sshra.s32 %s393, 7
          %s399 = sand.u32 %s393, 127
          %s400 = sadd.s32 %s397, %s399
          %s401 = sld [smem:[#allocation4 + %s400]]
          %s402 = smul.u32 16, %s39
          %p403 = scmp.lt.s32.totalorder %s401, 7
          %s404 = scalar_select %p403, %s401, 7
          %p405 = scmp.lt.s32.totalorder %s402, 15
          %s406 = scalar_select %p405, %s402, 15
          %s407 = smul.addr %s404, 16
          %s408 = sadd.s32 %s406, %s407
          %s409 = smul.addr %s408, 4
          %s410 = scalar_lea.vmem %s4, %s409
          %s411 = smul.u32 %s41, 4
          %s412 = sadd.s32 %s411, 1
          %s413 = sshra.s32 %s412, 7
          %s414 = sand.u32 %s412, 127
          %s415 = sadd.s32 %s413, %s40
          %s416 = smul.u32 %s415, 128
          %s417 = sshra.s32 %s412, 7
          %s418 = sand.u32 %s412, 127
          %s419 = sadd.s32 %s416, %s418
          %s420 = sld [smem:[#allocation4 + %s419]]
          %s421 = smul.u32 16, %s39
        $region24: #{tpu_custom_call.1} parent=15 // pred_fallthru
          _
        // Predicated region
        $region25: #{tpu_custom_call.1} parent=15 // pred_check
          %p422 = pneg %p187
        $region26: #{tpu_custom_call.1} parent=15 // pred_check_branch
          %424 = sbr.rel (%p422) target = $region28
        $region27: #{tpu_custom_call.1} parent=15 // pred_region
          %s425 = smul.u32 %s41, 4
          %s426 = sadd.s32 %s425, 2
          %s427 = sshra.s32 %s426, 7
          %s428 = sand.u32 %s426, 127
          %s429 = sadd.s32 %s427, %s40
          %s430 = smul.u32 %s429, 128
          %s431 = sshra.s32 %s426, 7
          %s432 = sand.u32 %s426, 127
          %s433 = sadd.s32 %s430, %s432
          %s434 = sld [smem:[#allocation4 + %s433]]
          %s435 = smul.u32 16, %s39
          %p436 = scmp.lt.s32.totalorder %s434, 7
          %s437 = scalar_select %p436, %s434, 7
          %p438 = scmp.lt.s32.totalorder %s435, 15
          %s439 = scalar_select %p438, %s435, 15
          %s440 = smul.addr %s437, 16
          %s441 = sadd.s32 %s439, %s440
          %s442 = smul.addr %s441, 4
          %s443 = scalar_lea.vmem %s5, %s442
          %s444 = smul.u32 %s41, 4
          %s445 = sadd.s32 %s444, 2
          %s446 = sshra.s32 %s445, 7
          %s447 = sand.u32 %s445, 127
          %s448 = sadd.s32 %s446, %s40
          %s449 = smul.u32 %s448, 128
          %s450 = sshra.s32 %s445, 7
          %s451 = sand.u32 %s445, 127
          %s452 = sadd.s32 %s449, %s451
          %s453 = sld [smem:[#allocation4 + %s452]]
          %s454 = smul.u32 16, %s39
        $region28: #{tpu_custom_call.1} parent=15 // pred_fallthru
          _
        // Predicated region
        $region29: #{tpu_custom_call.1} parent=15 // pred_check
          %p455 = pneg %p235
        $region30: #{tpu_custom_call.1} parent=15 // pred_check_branch
          %457 = sbr.rel (%p455) target = $region32
        $region31: #{tpu_custom_call.1} parent=15 // pred_region
          %s458 = smul.u32 %s41, 4
          %s459 = sadd.s32 %s458, 3
          %s460 = sshra.s32 %s459, 7
          %s461 = sand.u32 %s459, 127
          %s462 = sadd.s32 %s460, %s40
          %s463 = smul.u32 %s462, 128
          %s464 = sshra.s32 %s459, 7
          %s465 = sand.u32 %s459, 127
          %s466 = sadd.s32 %s463, %s465
          %s467 = sld [smem:[#allocation4 + %s466]]
          %s468 = smul.u32 16, %s39
          %p469 = scmp.lt.s32.totalorder %s467, 7
          %s470 = scalar_select %p469, %s467, 7
          %p471 = scmp.lt.s32.totalorder %s468, 15
          %s472 = scalar_select %p471, %s468, 15
          %s473 = smul.addr %s470, 16
          %s474 = sadd.s32 %s472, %s473
          %s475 = smul.addr %s474, 4
          %s476 = scalar_lea.vmem %s6, %s475
          %s477 = smul.u32 %s41, 4
          %s478 = sadd.s32 %s477, 3
          %s479 = sshra.s32 %s478, 7
          %s480 = sand.u32 %s478, 127
          %s481 = sadd.s32 %s479, %s40
          %s482 = smul.u32 %s481, 128
          %s483 = sshra.s32 %s478, 7
          %s484 = sand.u32 %s478, 127
          %s485 = sadd.s32 %s482, %s484
          %s486 = sld [smem:[#allocation4 + %s485]]
          %s487 = smul.u32 16, %s39
        $region32: #{tpu_custom_call.1} parent=15 // pred_fallthru
          _
        // Predicated region
        $region33: #{tpu_custom_call.1} parent=15 // pred_check
          %p488 = pneg %p279
        $region34: #{tpu_custom_call.1} parent=15 // pred_check_branch
          %490 = sbr.rel (%p488) target = $region36
        $region35: #{tpu_custom_call.1} parent=15 // pred_region
          %s491 = sshra.s32 %s41, 7
          %s492 = sand.u32 %s41, 127
          %s493 = sadd.s32 %s491, %s40
          %s494 = smul.u32 %s493, 128
          %s495 = sshra.s32 %s41, 7
          %s496 = sand.u32 %s41, 127
          %s497 = sadd.s32 %s494, %s496
          %s498 = sld [smem:[#allocation5 + %s497]]
          %p499 = scmp.lt.s32.totalorder %s40, 1
          %s500 = scalar_select %p499, %s40, 1
          %p501 = scmp.lt.s32.totalorder %s498, 1
          %s502 = scalar_select %p501, %s498, 1
          %s503 = smul.addr %s502, 16
          %s504 = smul.addr %s500, 32
          %s505 = sadd.s32 %s503, %s504
          %s506 = smul.addr %s505, 4
          %s507 = scalar_lea.vmem %s7, %s506
          %s508 = sshra.s32 %s41, 7
          %s509 = sand.u32 %s41, 127
          %s510 = sadd.s32 %s508, %s40
          %s511 = smul.u32 %s510, 128
          %s512 = sshra.s32 %s41, 7
          %s513 = sand.u32 %s41, 127
          %s514 = sadd.s32 %s511, %s513
          %s515 = sld [smem:[#allocation5 + %s514]]
        $region36: #{tpu_custom_call.1} parent=15 // pred_fallthru
          _
        // Predicated region
        $region37: #{tpu_custom_call.1} parent=15 // pred_check
          %p516 = pneg %p305
        $region38: #{tpu_custom_call.1} parent=15 // pred_check_branch
          %518 = sbr.rel (%p516) target = $region40
        $region39: #{tpu_custom_call.1} parent=15 // pred_region
          %p519 = scmp.lt.s32.totalorder %s40, 1
          %s520 = scalar_select %p519, %s40, 1
          %s521 = scalar_lea.vmem %s8, %s520
        $region40: #{tpu_custom_call.1} parent=15 // pred_fallthru
          _
      $region16: #{tpu_custom_call.1} parent=5 // pred_fallthru
        _
      %p522 = scmp.le.s32.totalorder 1, %s32
      %p523 = scmp.lt.s32.totalorder %s32, 5
      %p524 = pnand %p522, %p523
      %p525 = pneg %p524
      // Predicated region
      $region41: #{tpu_custom_call.1} parent=5 // pred_check
        _
      $region42: #{tpu_custom_call.1} parent=5 // pred_check_branch
        %527 = sbr.rel (%p524) target = $region44
      $region43: #{tpu_custom_call.1} parent=5 // pred_region
        %s528 = ssub.s32 %s32, 1
        %s529 = smul.u32 %s44, 4
        %s530 = sshra.s32 %s529, 7
        %s531 = sand.u32 %s529, 127
        %s532 = sadd.s32 %s530, %s43
        %s533 = smul.u32 %s532, 128
        %s534 = sshra.s32 %s529, 7
        %s535 = sand.u32 %s529, 127
        %s536 = sadd.s32 %s533, %s535
        %s537 = sld [smem:[#allocation4 + %s536]]
        %s538 = smul.u32 16, %s42
        %p539 = scmp.lt.s32.totalorder %s537, 7
        %s540 = scalar_select %p539, %s537, 7
        %p541 = scmp.lt.s32.totalorder %s538, 15
        %s542 = scalar_select %p541, %s538, 15
        %s543 = smul.addr %s540, 16
        %s544 = sadd.s32 %s542, %s543
        %s545 = smul.addr %s544, 4
        %s546 = scalar_lea.vmem %s3, %s545
        %p547 = pneg %p97
        %p548 = pneg %p94
        %s549 = smul.u32 %s44, 4
        %s550 = sadd.s32 %s549, 1
        %s551 = sshra.s32 %s550, 7
        %s552 = sand.u32 %s550, 127
        %s553 = sadd.s32 %s551, %s43
        %s554 = smul.u32 %s553, 128
        %s555 = sshra.s32 %s550, 7
        %s556 = sand.u32 %s550, 127
        %s557 = sadd.s32 %s554, %s556
        %s558 = sld [smem:[#allocation4 + %s557]]
        %s559 = smul.u32 16, %s42
        %p560 = scmp.lt.s32.totalorder %s558, 7
        %s561 = scalar_select %p560, %s558, 7
        %p562 = scmp.lt.s32.totalorder %s559, 15
        %s563 = scalar_select %p562, %s559, 15
        %s564 = smul.addr %s561, 16
        %s565 = sadd.s32 %s563, %s564
        %s566 = smul.addr %s565, 4
        %s567 = scalar_lea.vmem %s4, %s566
        %p568 = pneg %p145
        %p569 = pneg %p142
        %s570 = smul.u32 %s44, 4
        %s571 = sadd.s32 %s570, 2
        %s572 = sshra.s32 %s571, 7
        %s573 = sand.u32 %s571, 127
        %s574 = sadd.s32 %s572, %s43
        %s575 = smul.u32 %s574, 128
        %s576 = sshra.s32 %s571, 7
        %s577 = sand.u32 %s571, 127
        %s578 = sadd.s32 %s575, %s577
        %s579 = sld [smem:[#allocation4 + %s578]]
        %s580 = smul.u32 16, %s42
        %p581 = scmp.lt.s32.totalorder %s579, 7
        %s582 = scalar_select %p581, %s579, 7
        %p583 = scmp.lt.s32.totalorder %s580, 15
        %s584 = scalar_select %p583, %s580, 15
        %s585 = smul.addr %s582, 16
        %s586 = sadd.s32 %s584, %s585
        %s587 = smul.addr %s586, 4
        %s588 = scalar_lea.vmem %s5, %s587
        %p589 = pneg %p193
        %p590 = pneg %p190
        %s591 = smul.u32 %s44, 4
        %s592 = sadd.s32 %s591, 3
        %s593 = sshra.s32 %s592, 7
        %s594 = sand.u32 %s592, 127
        %s595 = sadd.s32 %s593, %s43
        %s596 = smul.u32 %s595, 128
        %s597 = sshra.s32 %s592, 7
        %s598 = sand.u32 %s592, 127
        %s599 = sadd.s32 %s596, %s598
        %s600 = sld [smem:[#allocation4 + %s599]]
        %s601 = smul.u32 16, %s42
        %p602 = scmp.lt.s32.totalorder %s600, 7
        %s603 = scalar_select %p602, %s600, 7
        %p604 = scmp.lt.s32.totalorder %s601, 15
        %s605 = scalar_select %p604, %s601, 15
        %s606 = smul.addr %s603, 16
        %s607 = sadd.s32 %s605, %s606
        %s608 = smul.addr %s607, 4
        %s609 = scalar_lea.vmem %s6, %s608
        %p610 = pneg %p241
        %p611 = pneg %p238
        %s612 = sshra.s32 %s44, 7
        %s613 = sand.u32 %s44, 127
        %s614 = sadd.s32 %s612, %s43
        %s615 = smul.u32 %s614, 128
        %s616 = sshra.s32 %s44, 7
        %s617 = sand.u32 %s44, 127
        %s618 = sadd.s32 %s615, %s617
        %s619 = sld [smem:[#allocation5 + %s618]]
        %p620 = scmp.lt.s32.totalorder %s43, 1
        %s621 = scalar_select %p620, %s43, 1
        %p622 = scmp.lt.s32.totalorder %s619, 1
        %s623 = scalar_select %p622, %s619, 1
        %s624 = smul.addr %s623, 16
        %s625 = smul.addr %s621, 32
        %s626 = sadd.s32 %s624, %s625
        %s627 = smul.addr %s626, 4
        %s628 = scalar_lea.vmem %s7, %s627
        %p629 = pneg %p285
        %p630 = pneg %p282
        %p631 = scmp.lt.s32.totalorder %s43, 1
        %s632 = scalar_select %p631, %s43, 1
        %s633 = scalar_lea.vmem %s8, %s632
        %p634 = pneg %p311
        %p635 = pneg %p308
        %p636 = pneg %p339
        %p637 = pneg %p336
        %s638 = sand.u32 %s326, 1
        %s639 = scalar_lea.sflag [#allocation8], %s638
        %s640 = sand.u32 %s326, 1
        %s641 = smul.addr %s640, 128
        %s642 = scalar_lea.vmem [#allocation7], %s641
        %s643 = smul.u32 %s44, 4
        %s644 = sshra.s32 %s643, 7
        %s645 = sand.u32 %s643, 127
        %s646 = sadd.s32 %s644, %s43
        %s647 = smul.u32 %s646, 128
        %s648 = sshra.s32 %s643, 7
        %s649 = sand.u32 %s643, 127
        %s650 = sadd.s32 %s647, %s649
        %s651 = sld [smem:[#allocation4 + %s650]]
        %s652 = smul.u32 16, %s42
        %p653 = scmp.lt.s32.totalorder %s651, 7
        %s654 = scalar_select %p653, %s651, 7
        %p655 = scmp.lt.s32.totalorder %s652, 15
        %s656 = scalar_select %p655, %s652, 15
        %s657 = smul.addr %s654, 16
        %s658 = sadd.s32 %s656, %s657
        %s659 = smul.addr %s658, 4
        %s660 = scalar_lea.vmem %s3, %s659
        %s661 = smul.u32 %s44, 4
        %s662 = sshra.s32 %s661, 7
        %s663 = sand.u32 %s661, 127
        %s664 = sadd.s32 %s662, %s43
        %s665 = smul.u32 %s664, 128
        %s666 = sshra.s32 %s661, 7
        %s667 = sand.u32 %s661, 127
        %s668 = sadd.s32 %s665, %s667
        %s669 = sld [smem:[#allocation4 + %s668]]
        %s670 = smul.u32 16, %s42
        %s671 = smul.u32 %s44, 4
        %s672 = sadd.s32 %s671, 1
        %s673 = sshra.s32 %s672, 7
        %s674 = sand.u32 %s672, 127
        %s675 = sadd.s32 %s673, %s43
        %s676 = smul.u32 %s675, 128
        %s677 = sshra.s32 %s672, 7
        %s678 = sand.u32 %s672, 127
        %s679 = sadd.s32 %s676, %s678
        %s680 = sld [smem:[#allocation4 + %s679]]
        %s681 = smul.u32 16, %s42
        %p682 = scmp.lt.s32.totalorder %s680, 7
        %s683 = scalar_select %p682, %s680, 7
        %p684 = scmp.lt.s32.totalorder %s681, 15
        %s685 = scalar_select %p684, %s681, 15
        %s686 = smul.addr %s683, 16
        %s687 = sadd.s32 %s685, %s686
        %s688 = smul.addr %s687, 4
        %s689 = scalar_lea.vmem %s4, %s688
        %s690 = smul.u32 %s44, 4
        %s691 = sadd.s32 %s690, 1
        %s692 = sshra.s32 %s691, 7
        %s693 = sand.u32 %s691, 127
        %s694 = sadd.s32 %s692, %s43
        %s695 = smul.u32 %s694, 128
        %s696 = sshra.s32 %s691, 7
        %s697 = sand.u32 %s691, 127
        %s698 = sadd.s32 %s695, %s697
        %s699 = sld [smem:[#allocation4 + %s698]]
        %s700 = smul.u32 16, %s42
        %s701 = smul.u32 %s44, 4
        %s702 = sadd.s32 %s701, 2
        %s703 = sshra.s32 %s702, 7
        %s704 = sand.u32 %s702, 127
        %s705 = sadd.s32 %s703, %s43
        %s706 = smul.u32 %s705, 128
        %s707 = sshra.s32 %s702, 7
        %s708 = sand.u32 %s702, 127
        %s709 = sadd.s32 %s706, %s708
        %s710 = sld [smem:[#allocation4 + %s709]]
        %s711 = smul.u32 16, %s42
        %p712 = scmp.lt.s32.totalorder %s710, 7
        %s713 = scalar_select %p712, %s710, 7
        %p714 = scmp.lt.s32.totalorder %s711, 15
        %s715 = scalar_select %p714, %s711, 15
        %s716 = smul.addr %s713, 16
        %s717 = sadd.s32 %s715, %s716
        %s718 = smul.addr %s717, 4
        %s719 = scalar_lea.vmem %s5, %s718
        %s720 = smul.u32 %s44, 4
        %s721 = sadd.s32 %s720, 2
        %s722 = sshra.s32 %s721, 7
        %s723 = sand.u32 %s721, 127
        %s724 = sadd.s32 %s722, %s43
        %s725 = smul.u32 %s724, 128
        %s726 = sshra.s32 %s721, 7
        %s727 = sand.u32 %s721, 127
        %s728 = sadd.s32 %s725, %s727
        %s729 = sld [smem:[#allocation4 + %s728]]
        %s730 = smul.u32 16, %s42
        %s731 = smul.u32 %s44, 4
        %s732 = sadd.s32 %s731, 3
        %s733 = sshra.s32 %s732, 7
        %s734 = sand.u32 %s732, 127
        %s735 = sadd.s32 %s733, %s43
        %s736 = smul.u32 %s735, 128
        %s737 = sshra.s32 %s732, 7
        %s738 = sand.u32 %s732, 127
        %s739 = sadd.s32 %s736, %s738
        %s740 = sld [smem:[#allocation4 + %s739]]
        %s741 = smul.u32 16, %s42
        %p742 = scmp.lt.s32.totalorder %s740, 7
        %s743 = scalar_select %p742, %s740, 7
        %p744 = scmp.lt.s32.totalorder %s741, 15
        %s745 = scalar_select %p744, %s741, 15
        %s746 = smul.addr %s743, 16
        %s747 = sadd.s32 %s745, %s746
        %s748 = smul.addr %s747, 4
        %s749 = scalar_lea.vmem %s6, %s748
        %s750 = smul.u32 %s44, 4
        %s751 = sadd.s32 %s750, 3
        %s752 = sshra.s32 %s751, 7
        %s753 = sand.u32 %s751, 127
        %s754 = sadd.s32 %s752, %s43
        %s755 = smul.u32 %s754, 128
        %s756 = sshra.s32 %s751, 7
        %s757 = sand.u32 %s751, 127
        %s758 = sadd.s32 %s755, %s757
        %s759 = sld [smem:[#allocation4 + %s758]]
        %s760 = smul.u32 16, %s42
        %s761 = sshra.s32 %s44, 7
        %s762 = sand.u32 %s44, 127
        %s763 = sadd.s32 %s761, %s43
        %s764 = smul.u32 %s763, 128
        %s765 = sshra.s32 %s44, 7
        %s766 = sand.u32 %s44, 127
        %s767 = sadd.s32 %s764, %s766
        %s768 = sld [smem:[#allocation5 + %s767]]
        %p769 = scmp.lt.s32.totalorder %s43, 1
        %s770 = scalar_select %p769, %s43, 1
        %p771 = scmp.lt.s32.totalorder %s768, 1
        %s772 = scalar_select %p771, %s768, 1
        %s773 = smul.addr %s772, 16
        %s774 = smul.addr %s770, 32
        %s775 = sadd.s32 %s773, %s774
        %s776 = smul.addr %s775, 4
        %s777 = scalar_lea.vmem %s7, %s776
        %s778 = sshra.s32 %s44, 7
        %s779 = sand.u32 %s44, 127
        %s780 = sadd.s32 %s778, %s43
        %s781 = smul.u32 %s780, 128
        %s782 = sshra.s32 %s44, 7
        %s783 = sand.u32 %s44, 127
        %s784 = sadd.s32 %s781, %s783
        %s785 = sld [smem:[#allocation5 + %s784]]
        %p786 = scmp.lt.s32.totalorder %s43, 1
        %s787 = scalar_select %p786, %s43, 1
        %s788 = scalar_lea.vmem %s8, %s787
        %s789 = smul.u32 16, %s42
        %p791 = scmp.eq.s32.totalorder %s44, 0
        // Predicated region
        $region45: #{tpu_custom_call.1} parent=43 // pred_check
          %p792 = pneg %p791
        $region46: #{tpu_custom_call.1} parent=43 // pred_check_branch
          %794 = sbr.rel (%p792) target = $region48
        $region47: #{tpu_custom_call.1} parent=43 // pred_region
          %v795 = vld [vmem:[%s788] sm:$0x1]
          %v797 = vlaneseq
          %v798 = vshrl.u32 %v797, 7
          %v799 = vsub.s32 0, %v798
          %v800 = vrot.slane %v795, %v799
          %802 = vst [vmem:[%s642] sm:$0xff] %v800
          %803 = vst [vmem:[%s642 + $0x8] sm:$0xff] %v800
          %804 = vst [vmem:[%s642 + $0x10] sm:$0xff] %v800
          %805 = vst [vmem:[%s642 + $0x18] sm:$0xff] %v800
          %806 = vst [vmem:[%s642 + $0x20] sm:$0xff] %v800
          %807 = vst [vmem:[%s642 + $0x28] sm:$0xff] %v800
          %808 = vst [vmem:[%s642 + $0x30] sm:$0xff] %v800
          %809 = vst [vmem:[%s642 + $0x38] sm:$0xff] %v800
          %810 = vst [vmem:[%s642 + $0x40] sm:$0xff] %v800
          %811 = vst [vmem:[%s642 + $0x48] sm:$0xff] %v800
          %812 = vst [vmem:[%s642 + $0x50] sm:$0xff] %v800
          %813 = vst [vmem:[%s642 + $0x58] sm:$0xff] %v800
          %814 = vst [vmem:[%s642 + $0x60] sm:$0xff] %v800
          %815 = vst [vmem:[%s642 + $0x68] sm:$0xff] %v800
          %816 = vst [vmem:[%s642 + $0x70] sm:$0xff] %v800
          %817 = vst [vmem:[%s642 + $0x78] sm:$0xff] %v800
        $region48: #{tpu_custom_call.1} parent=43 // pred_fallthru
          _
        %s818 = sld [smem:[#allocation6 + %s43]]
        %p819 = scmp.lt.s32.totalorder %s44, %s818
        // Predicated region
        $region49: #{tpu_custom_call.1} parent=43 // pred_check
          %p820 = pneg %p819
        $region50: #{tpu_custom_call.1} parent=43 // pred_check_branch
          %822 = sbr.rel (%p820) target = $region52
        $region51: #{tpu_custom_call.1} parent=43 // pred_region
          %v823 = vld [vmem:[%s660] sm:$0xf]
          %v824 = vld [vmem:[%s660 + $0x4] sm:$0xf]
          %v825 = vld [vmem:[%s660 + $0x8] sm:$0xf]
          %v826 = vld [vmem:[%s660 + $0xc] sm:$0xf]
          %v827 = vld [vmem:[%s660 + $0x10] sm:$0xf]
          %v828 = vld [vmem:[%s660 + $0x14] sm:$0xf]
          %v829 = vld [vmem:[%s660 + $0x18] sm:$0xf]
          %v830 = vld [vmem:[%s660 + $0x1c] sm:$0xf]
          %v831 = vld [vmem:[%s660 + $0x20] sm:$0xf]
          %v832 = vld [vmem:[%s660 + $0x24] sm:$0xf]
          %v833 = vld [vmem:[%s660 + $0x28] sm:$0xf]
          %v834 = vld [vmem:[%s660 + $0x2c] sm:$0xf]
          %v835 = vld [vmem:[%s660 + $0x30] sm:$0xf]
          %v836 = vld [vmem:[%s660 + $0x34] sm:$0xf]
          %v837 = vld [vmem:[%s660 + $0x38] sm:$0xf]
          %v838 = vld [vmem:[%s660 + $0x3c] sm:$0xf]
          %vm839 = vcmask 257024
          %840 = vst.msk [vmem:[#allocation2] sm:$0xf] %vm839, %v823
          %841 = vst.msk [vmem:[#allocation2 + $0x4] sm:$0xf] %vm839, %v824
          %842 = vst.msk [vmem:[#allocation2 + $0x8] sm:$0xf] %vm839, %v825
          %843 = vst.msk [vmem:[#allocation2 + $0xc] sm:$0xf] %vm839, %v826
          %844 = vst.msk [vmem:[#allocation2 + $0x10] sm:$0xf] %vm839, %v827
          %845 = vst.msk [vmem:[#allocation2 + $0x14] sm:$0xf] %vm839, %v828
          %846 = vst.msk [vmem:[#allocation2 + $0x18] sm:$0xf] %vm839, %v829
          %847 = vst.msk [vmem:[#allocation2 + $0x1c] sm:$0xf] %vm839, %v830
          %848 = vst.msk [vmem:[#allocation2 + $0x20] sm:$0xf] %vm839, %v831
          %849 = vst.msk [vmem:[#allocation2 + $0x24] sm:$0xf] %vm839, %v832
          %850 = vst.msk [vmem:[#allocation2 + $0x28] sm:$0xf] %vm839, %v833
          %851 = vst.msk [vmem:[#allocation2 + $0x2c] sm:$0xf] %vm839, %v834
          %852 = vst.msk [vmem:[#allocation2 + $0x30] sm:$0xf] %vm839, %v835
          %853 = vst.msk [vmem:[#allocation2 + $0x34] sm:$0xf] %vm839, %v836
          %854 = vst.msk [vmem:[#allocation2 + $0x38] sm:$0xf] %vm839, %v837
          %855 = vst.msk [vmem:[#allocation2 + $0x3c] sm:$0xf] %vm839, %v838
          %v856 = vld [vmem:[%s689] sm:$0xf]
          %v857 = vld [vmem:[%s689 + $0x4] sm:$0xf]
          %v858 = vld [vmem:[%s689 + $0x8] sm:$0xf]
          %v859 = vld [vmem:[%s689 + $0xc] sm:$0xf]
          %v860 = vld [vmem:[%s689 + $0x10] sm:$0xf]
          %v861 = vld [vmem:[%s689 + $0x14] sm:$0xf]
          %v862 = vld [vmem:[%s689 + $0x18] sm:$0xf]
          %v863 = vld [vmem:[%s689 + $0x1c] sm:$0xf]
          %v864 = vld [vmem:[%s689 + $0x20] sm:$0xf]
          %v865 = vld [vmem:[%s689 + $0x24] sm:$0xf]
          %v866 = vld [vmem:[%s689 + $0x28] sm:$0xf]
          %v867 = vld [vmem:[%s689 + $0x2c] sm:$0xf]
          %v868 = vld [vmem:[%s689 + $0x30] sm:$0xf]
          %v869 = vld [vmem:[%s689 + $0x34] sm:$0xf]
          %v870 = vld [vmem:[%s689 + $0x38] sm:$0xf]
          %v871 = vld [vmem:[%s689 + $0x3c] sm:$0xf]
          %888 = vrot.lane.b32.xlu0 %v856, 32
          %v889 = vpop.permute.xlu0 %888
          %890 = vrot.lane.b32.xlu0 %v857, 32
          %v891 = vpop.permute.xlu0 %890
          %892 = vrot.lane.b32.xlu0 %v858, 32
          %v893 = vpop.permute.xlu0 %892
          %894 = vrot.lane.b32.xlu0 %v859, 32
          %v895 = vpop.permute.xlu0 %894
          %896 = vrot.lane.b32.xlu0 %v860, 32
          %v897 = vpop.permute.xlu0 %896
          %898 = vrot.lane.b32.xlu0 %v861, 32
          %v899 = vpop.permute.xlu0 %898
          %900 = vrot.lane.b32.xlu0 %v862, 32
          %v901 = vpop.permute.xlu0 %900
          %902 = vrot.lane.b32.xlu0 %v863, 32
          %v903 = vpop.permute.xlu0 %902
          %904 = vrot.lane.b32.xlu0 %v864, 32
          %v905 = vpop.permute.xlu0 %904
          %906 = vrot.lane.b32.xlu0 %v865, 32
          %v907 = vpop.permute.xlu0 %906
          %908 = vrot.lane.b32.xlu0 %v866, 32
          %v909 = vpop.permute.xlu0 %908
          %910 = vrot.lane.b32.xlu0 %v867, 32
          %v911 = vpop.permute.xlu0 %910
          %912 = vrot.lane.b32.xlu0 %v868, 32
          %v913 = vpop.permute.xlu0 %912
          %914 = vrot.lane.b32.xlu0 %v869, 32
          %v915 = vpop.permute.xlu0 %914
          %916 = vrot.lane.b32.xlu0 %v870, 32
          %v917 = vpop.permute.xlu0 %916
          %918 = vrot.lane.b32.xlu0 %v871, 32
          %v919 = vpop.permute.xlu0 %918
          %vm936 = vcmask 519424
          %937 = vst.msk [vmem:[#allocation2] sm:$0xf] %vm936, %v889
          %938 = vst.msk [vmem:[#allocation2 + $0x4] sm:$0xf] %vm936, %v891
          %939 = vst.msk [vmem:[#allocation2 + $0x8] sm:$0xf] %vm936, %v893
          %940 = vst.msk [vmem:[#allocation2 + $0xc] sm:$0xf] %vm936, %v895
          %941 = vst.msk [vmem:[#allocation2 + $0x10] sm:$0xf] %vm936, %v897
          %942 = vst.msk [vmem:[#allocation2 + $0x14] sm:$0xf] %vm936, %v899
          %943 = vst.msk [vmem:[#allocation2 + $0x18] sm:$0xf] %vm936, %v901
          %944 = vst.msk [vmem:[#allocation2 + $0x1c] sm:$0xf] %vm936, %v903
          %945 = vst.msk [vmem:[#allocation2 + $0x20] sm:$0xf] %vm936, %v905
          %946 = vst.msk [vmem:[#allocation2 + $0x24] sm:$0xf] %vm936, %v907
          %947 = vst.msk [vmem:[#allocation2 + $0x28] sm:$0xf] %vm936, %v909
          %948 = vst.msk [vmem:[#allocation2 + $0x2c] sm:$0xf] %vm936, %v911
          %949 = vst.msk [vmem:[#allocation2 + $0x30] sm:$0xf] %vm936, %v913
          %950 = vst.msk [vmem:[#allocation2 + $0x34] sm:$0xf] %vm936, %v915
          %951 = vst.msk [vmem:[#allocation2 + $0x38] sm:$0xf] %vm936, %v917
          %952 = vst.msk [vmem:[#allocation2 + $0x3c] sm:$0xf] %vm936, %v919
          %v953 = vld [vmem:[%s719] sm:$0xf]
          %v954 = vld [vmem:[%s719 + $0x4] sm:$0xf]
          %v955 = vld [vmem:[%s719 + $0x8] sm:$0xf]
          %v956 = vld [vmem:[%s719 + $0xc] sm:$0xf]
          %v957 = vld [vmem:[%s719 + $0x10] sm:$0xf]
          %v958 = vld [vmem:[%s719 + $0x14] sm:$0xf]
          %v959 = vld [vmem:[%s719 + $0x18] sm:$0xf]
          %v960 = vld [vmem:[%s719 + $0x1c] sm:$0xf]
          %v961 = vld [vmem:[%s719 + $0x20] sm:$0xf]
          %v962 = vld [vmem:[%s719 + $0x24] sm:$0xf]
          %v963 = vld [vmem:[%s719 + $0x28] sm:$0xf]
          %v964 = vld [vmem:[%s719 + $0x2c] sm:$0xf]
          %v965 = vld [vmem:[%s719 + $0x30] sm:$0xf]
          %v966 = vld [vmem:[%s719 + $0x34] sm:$0xf]
          %v967 = vld [vmem:[%s719 + $0x38] sm:$0xf]
          %v968 = vld [vmem:[%s719 + $0x3c] sm:$0xf]
          %985 = vrot.lane.b32.xlu0 %v953, 64
          %v986 = vpop.permute.xlu0 %985
          %987 = vrot.lane.b32.xlu0 %v954, 64
          %v988 = vpop.permute.xlu0 %987
          %989 = vrot.lane.b32.xlu0 %v955, 64
          %v990 = vpop.permute.xlu0 %989
          %991 = vrot.lane.b32.xlu0 %v956, 64
          %v992 = vpop.permute.xlu0 %991
          %993 = vrot.lane.b32.xlu0 %v957, 64
          %v994 = vpop.permute.xlu0 %993
          %995 = vrot.lane.b32.xlu0 %v958, 64
          %v996 = vpop.permute.xlu0 %995
          %997 = vrot.lane.b32.xlu0 %v959, 64
          %v998 = vpop.permute.xlu0 %997
          %999 = vrot.lane.b32.xlu0 %v960, 64
          %v1000 = vpop.permute.xlu0 %999
          %1001 = vrot.lane.b32.xlu0 %v961, 64
          %v1002 = vpop.permute.xlu0 %1001
          %1003 = vrot.lane.b32.xlu0 %v962, 64
          %v1004 = vpop.permute.xlu0 %1003
          %1005 = vrot.lane.b32.xlu0 %v963, 64
          %v1006 = vpop.permute.xlu0 %1005
          %1007 = vrot.lane.b32.xlu0 %v964, 64
          %v1008 = vpop.permute.xlu0 %1007
          %1009 = vrot.lane.b32.xlu0 %v965, 64
          %v1010 = vpop.permute.xlu0 %1009
          %1011 = vrot.lane.b32.xlu0 %v966, 64
          %v1012 = vpop.permute.xlu0 %1011
          %1013 = vrot.lane.b32.xlu0 %v967, 64
          %v1014 = vpop.permute.xlu0 %1013
          %1015 = vrot.lane.b32.xlu0 %v968, 64
          %v1016 = vpop.permute.xlu0 %1015
          %vm1033 = vcmask 781824
          %1034 = vst.msk [vmem:[#allocation2] sm:$0xf] %vm1033, %v986
          %1035 = vst.msk [vmem:[#allocation2 + $0x4] sm:$0xf] %vm1033, %v988
          %1036 = vst.msk [vmem:[#allocation2 + $0x8] sm:$0xf] %vm1033, %v990
          %1037 = vst.msk [vmem:[#allocation2 + $0xc] sm:$0xf] %vm1033, %v992
          %1038 = vst.msk [vmem:[#allocation2 + $0x10] sm:$0xf] %vm1033, %v994
          %1039 = vst.msk [vmem:[#allocation2 + $0x14] sm:$0xf] %vm1033, %v996
          %1040 = vst.msk [vmem:[#allocation2 + $0x18] sm:$0xf] %vm1033, %v998
          %1041 = vst.msk [vmem:[#allocation2 + $0x1c] sm:$0xf] %vm1033, %v1000
          %1042 = vst.msk [vmem:[#allocation2 + $0x20] sm:$0xf] %vm1033, %v1002
          %1043 = vst.msk [vmem:[#allocation2 + $0x24] sm:$0xf] %vm1033, %v1004
          %1044 = vst.msk [vmem:[#allocation2 + $0x28] sm:$0xf] %vm1033, %v1006
          %1045 = vst.msk [vmem:[#allocation2 + $0x2c] sm:$0xf] %vm1033, %v1008
          %1046 = vst.msk [vmem:[#allocation2 + $0x30] sm:$0xf] %vm1033, %v1010
          %1047 = vst.msk [vmem:[#allocation2 + $0x34] sm:$0xf] %vm1033, %v1012
          %1048 = vst.msk [vmem:[#allocation2 + $0x38] sm:$0xf] %vm1033, %v1014
          %1049 = vst.msk [vmem:[#allocation2 + $0x3c] sm:$0xf] %vm1033, %v1016
          %v1050 = vld [vmem:[%s749] sm:$0xf]
          %v1051 = vld [vmem:[%s749 + $0x4] sm:$0xf]
          %v1052 = vld [vmem:[%s749 + $0x8] sm:$0xf]
          %v1053 = vld [vmem:[%s749 + $0xc] sm:$0xf]
          %v1054 = vld [vmem:[%s749 + $0x10] sm:$0xf]
          %v1055 = vld [vmem:[%s749 + $0x14] sm:$0xf]
          %v1056 = vld [vmem:[%s749 + $0x18] sm:$0xf]
          %v1057 = vld [vmem:[%s749 + $0x1c] sm:$0xf]
          %v1058 = vld [vmem:[%s749 + $0x20] sm:$0xf]
          %v1059 = vld [vmem:[%s749 + $0x24] sm:$0xf]
          %v1060 = vld [vmem:[%s749 + $0x28] sm:$0xf]
          %v1061 = vld [vmem:[%s749 + $0x2c] sm:$0xf]
          %v1062 = vld [vmem:[%s749 + $0x30] sm:$0xf]
          %v1063 = vld [vmem:[%s749 + $0x34] sm:$0xf]
          %v1064 = vld [vmem:[%s749 + $0x38] sm:$0xf]
          %v1065 = vld [vmem:[%s749 + $0x3c] sm:$0xf]
          %1082 = vrot.lane.b32.xlu0 %v1050, 96
          %v1083 = vpop.permute.xlu0 %1082
          %1084 = vrot.lane.b32.xlu0 %v1051, 96
          %v1085 = vpop.permute.xlu0 %1084
          %1086 = vrot.lane.b32.xlu0 %v1052, 96
          %v1087 = vpop.permute.xlu0 %1086
          %1088 = vrot.lane.b32.xlu0 %v1053, 96
          %v1089 = vpop.permute.xlu0 %1088
          %1090 = vrot.lane.b32.xlu0 %v1054, 96
          %v1091 = vpop.permute.xlu0 %1090
          %1092 = vrot.lane.b32.xlu0 %v1055, 96
          %v1093 = vpop.permute.xlu0 %1092
          %1094 = vrot.lane.b32.xlu0 %v1056, 96
          %v1095 = vpop.permute.xlu0 %1094
          %1096 = vrot.lane.b32.xlu0 %v1057, 96
          %v1097 = vpop.permute.xlu0 %1096
          %1098 = vrot.lane.b32.xlu0 %v1058, 96
          %v1099 = vpop.permute.xlu0 %1098
          %1100 = vrot.lane.b32.xlu0 %v1059, 96
          %v1101 = vpop.permute.xlu0 %1100
          %1102 = vrot.lane.b32.xlu0 %v1060, 96
          %v1103 = vpop.permute.xlu0 %1102
          %1104 = vrot.lane.b32.xlu0 %v1061, 96
          %v1105 = vpop.permute.xlu0 %1104
          %1106 = vrot.lane.b32.xlu0 %v1062, 96
          %v1107 = vpop.permute.xlu0 %1106
          %1108 = vrot.lane.b32.xlu0 %v1063, 96
          %v1109 = vpop.permute.xlu0 %1108
          %1110 = vrot.lane.b32.xlu0 %v1064, 96
          %v1111 = vpop.permute.xlu0 %1110
          %1112 = vrot.lane.b32.xlu0 %v1065, 96
          %v1113 = vpop.permute.xlu0 %1112
          %vm1130 = vcmask 1044224
          %1131 = vst.msk [vmem:[#allocation2] sm:$0xf] %vm1130, %v1083
          %1132 = vst.msk [vmem:[#allocation2 + $0x4] sm:$0xf] %vm1130, %v1085
          %1133 = vst.msk [vmem:[#allocation2 + $0x8] sm:$0xf] %vm1130, %v1087
          %1134 = vst.msk [vmem:[#allocation2 + $0xc] sm:$0xf] %vm1130, %v1089
          %1135 = vst.msk [vmem:[#allocation2 + $0x10] sm:$0xf] %vm1130, %v1091
          %1136 = vst.msk [vmem:[#allocation2 + $0x14] sm:$0xf] %vm1130, %v1093
          %1137 = vst.msk [vmem:[#allocation2 + $0x18] sm:$0xf] %vm1130, %v1095
          %1138 = vst.msk [vmem:[#allocation2 + $0x1c] sm:$0xf] %vm1130, %v1097
          %1139 = vst.msk [vmem:[#allocation2 + $0x20] sm:$0xf] %vm1130, %v1099
          %1140 = vst.msk [vmem:[#allocation2 + $0x24] sm:$0xf] %vm1130, %v1101
          %1141 = vst.msk [vmem:[#allocation2 + $0x28] sm:$0xf] %vm1130, %v1103
          %1142 = vst.msk [vmem:[#allocation2 + $0x2c] sm:$0xf] %vm1130, %v1105
          %1143 = vst.msk [vmem:[#allocation2 + $0x30] sm:$0xf] %vm1130, %v1107
          %1144 = vst.msk [vmem:[#allocation2 + $0x34] sm:$0xf] %vm1130, %v1109
          %1145 = vst.msk [vmem:[#allocation2 + $0x38] sm:$0xf] %vm1130, %v1111
          %1146 = vst.msk [vmem:[#allocation2 + $0x3c] sm:$0xf] %vm1130, %v1113
          %v1147 = vld [vmem:[%s642] sm:$0xff]
          %v1148 = vld [vmem:[%s642 + $0x8] sm:$0xff]
          %v1149 = vld [vmem:[%s642 + $0x10] sm:$0xff]
          %v1150 = vld [vmem:[%s642 + $0x18] sm:$0xff]
          %v1151 = vld [vmem:[%s642 + $0x20] sm:$0xff]
          %v1152 = vld [vmem:[%s642 + $0x28] sm:$0xff]
          %v1153 = vld [vmem:[%s642 + $0x30] sm:$0xff]
          %v1154 = vld [vmem:[%s642 + $0x38] sm:$0xff]
          %v1155 = vld [vmem:[%s642 + $0x40] sm:$0xff]
          %v1156 = vld [vmem:[%s642 + $0x48] sm:$0xff]
          %v1157 = vld [vmem:[%s642 + $0x50] sm:$0xff]
          %v1158 = vld [vmem:[%s642 + $0x58] sm:$0xff]
          %v1159 = vld [vmem:[%s642 + $0x60] sm:$0xff]
          %v1160 = vld [vmem:[%s642 + $0x68] sm:$0xff]
          %v1161 = vld [vmem:[%s642 + $0x70] sm:$0xff]
          %v1162 = vld [vmem:[%s642 + $0x78] sm:$0xff]
          %v1163 = vld [vmem:[#allocation2] sm:$0xf]
          %v1164 = vld [vmem:[#allocation2 + $0x4] sm:$0xf]
          %v1165 = vld [vmem:[#allocation2 + $0x8] sm:$0xf]
          %v1166 = vld [vmem:[#allocation2 + $0xc] sm:$0xf]
          %v1167 = vld [vmem:[#allocation2 + $0x10] sm:$0xf]
          %v1168 = vld [vmem:[#allocation2 + $0x14] sm:$0xf]
          %v1169 = vld [vmem:[#allocation2 + $0x18] sm:$0xf]
          %v1170 = vld [vmem:[#allocation2 + $0x1c] sm:$0xf]
          %v1171 = vld [vmem:[#allocation2 + $0x20] sm:$0xf]
          %v1172 = vld [vmem:[#allocation2 + $0x24] sm:$0xf]
          %v1173 = vld [vmem:[#allocation2 + $0x28] sm:$0xf]
          %v1174 = vld [vmem:[#allocation2 + $0x2c] sm:$0xf]
          %v1175 = vld [vmem:[#allocation2 + $0x30] sm:$0xf]
          %v1176 = vld [vmem:[#allocation2 + $0x34] sm:$0xf]
          %v1177 = vld [vmem:[#allocation2 + $0x38] sm:$0xf]
          %v1178 = vld [vmem:[#allocation2 + $0x3c] sm:$0xf]
          %v1179 = vld [vmem:[%s777] sm:$0xf]
          %v1180 = vld [vmem:[%s777 + $0x4] sm:$0xf]
          %v1181 = vld [vmem:[%s777 + $0x8] sm:$0xf]
          %v1182 = vld [vmem:[%s777 + $0xc] sm:$0xf]
          %v1183 = vld [vmem:[%s777 + $0x10] sm:$0xf]
          %v1184 = vld [vmem:[%s777 + $0x14] sm:$0xf]
          %v1185 = vld [vmem:[%s777 + $0x18] sm:$0xf]
          %v1186 = vld [vmem:[%s777 + $0x1c] sm:$0xf]
          %v1187 = vld [vmem:[%s777 + $0x20] sm:$0xf]
          %v1188 = vld [vmem:[%s777 + $0x24] sm:$0xf]
          %v1189 = vld [vmem:[%s777 + $0x28] sm:$0xf]
          %v1190 = vld [vmem:[%s777 + $0x2c] sm:$0xf]
          %v1191 = vld [vmem:[%s777 + $0x30] sm:$0xf]
          %v1192 = vld [vmem:[%s777 + $0x34] sm:$0xf]
          %v1193 = vld [vmem:[%s777 + $0x38] sm:$0xf]
          %v1194 = vld [vmem:[%s777 + $0x3c] sm:$0xf]
          %v1211 = vunpack.c.l.b16 %v1163
          %v1212 = vunpack.c.l.b16 %v1164
          %v1213 = vunpack.c.l.b16 %v1165
          %v1214 = vunpack.c.l.b16 %v1166
          %v1215 = vunpack.c.l.b16 %v1167
          %v1216 = vunpack.c.l.b16 %v1168
          %v1217 = vunpack.c.l.b16 %v1169
          %v1218 = vunpack.c.l.b16 %v1170
          %v1219 = vunpack.c.l.b16 %v1171
          %v1220 = vunpack.c.l.b16 %v1172
          %v1221 = vunpack.c.l.b16 %v1173
          %v1222 = vunpack.c.l.b16 %v1174
          %v1223 = vunpack.c.l.b16 %v1175
          %v1224 = vunpack.c.l.b16 %v1176
          %v1225 = vunpack.c.l.b16 %v1177
          %v1226 = vunpack.c.l.b16 %v1178
          %v1227 = vpack.c.b16 %v1212, %v1211
          %v1228 = vpack.c.b16 %v1214, %v1213
          %v1229 = vpack.c.b16 %v1216, %v1215
          %v1230 = vpack.c.b16 %v1218, %v1217
          %v1231 = vpack.c.b16 %v1220, %v1219
          %v1232 = vpack.c.b16 %v1222, %v1221
          %v1233 = vpack.c.b16 %v1224, %v1223
          %v1234 = vpack.c.b16 %v1226, %v1225
          %v1259 = vunpack.c.l.b16 %v1179
          %v1260 = vunpack.c.l.b16 %v1180
          %v1261 = vunpack.c.l.b16 %v1181
          %v1262 = vunpack.c.l.b16 %v1182
          %v1263 = vunpack.c.l.b16 %v1183
          %v1264 = vunpack.c.l.b16 %v1184
          %v1265 = vunpack.c.l.b16 %v1185
          %v1266 = vunpack.c.l.b16 %v1186
          %v1267 = vunpack.c.l.b16 %v1187
          %v1268 = vunpack.c.l.b16 %v1188
          %v1269 = vunpack.c.l.b16 %v1189
          %v1270 = vunpack.c.l.b16 %v1190
          %v1271 = vunpack.c.l.b16 %v1191
          %v1272 = vunpack.c.l.b16 %v1192
          %v1273 = vunpack.c.l.b16 %v1193
          %v1274 = vunpack.c.l.b16 %v1194
          %v1275 = vpack.c.b16 %v1260, %v1259
          %v1276 = vpack.c.b16 %v1262, %v1261
          %v1277 = vpack.c.b16 %v1264, %v1263
          %v1278 = vpack.c.b16 %v1266, %v1265
          %v1279 = vpack.c.b16 %v1268, %v1267
          %v1280 = vpack.c.b16 %v1270, %v1269
          %v1281 = vpack.c.b16 %v1272, %v1271
          %v1282 = vpack.c.b16 %v1274, %v1273
          %1291 = vmatprep.subr.bf16.mxu0 0
          %1292 = vmatpush1.bf16.msra.mxu0 %v1282
          %1293 = vmatprep.subr.bf16.mxu0 0
          %1294 = vmatpush1.bf16.msra.mxu0 %v1281
          %1295 = vmatprep.subr.bf16.mxu0 0
          %1296 = vmatpush1.bf16.msra.mxu0 %v1280
          %1297 = vmatprep.subr.bf16.mxu0 0
          %1298 = vmatpush1.bf16.msra.mxu0 %v1279
          %1299 = vmatprep.subr.bf16.mxu0 0
          %1300 = vmatpush1.bf16.msra.mxu0 %v1278
          %1301 = vmatprep.subr.bf16.mxu0 0
          %1302 = vmatpush1.bf16.msra.mxu0 %v1277
          %1303 = vmatprep.subr.bf16.mxu0 0
          %1304 = vmatpush1.bf16.msra.mxu0 %v1276
          %1305 = vmatprep.subr.bf16.mxu0 0
          %1306 = vmatpush1.bf16.msra.mxu0 %v1275
          %1307 = vmatprep.subr.bf16.mxu0 0
          %1308 = vmatpush2.bf16.msra.mxu0 0
          %1309 = vmatprep.subr.bf16.mxu0 0
          %1310 = vmatpush2.bf16.msra.mxu0 0
          %1311 = vmatprep.subr.bf16.mxu0 0
          %1312 = vmatpush2.bf16.msra.mxu0 0
          %1313 = vmatprep.subr.bf16.mxu0 0
          %1314 = vmatpush2.bf16.msra.mxu0 0
          %1315 = vmatprep.subr.bf16.mxu0 0
          %1316 = vmatpush2.bf16.msra.mxu0 0
          %1317 = vmatprep.subr.bf16.mxu0 0
          %1318 = vmatpush2.bf16.msra.mxu0 0
          %1319 = vmatprep.subr.bf16.mxu0 0
          %1320 = vmatpush2.bf16.msra.mxu0 0
          %1321 = vmatprep.subr.bf16.mxu0 0
          %1322 = vmatpush2.bf16.msra.mxu0 0
          %1323 = vmatprep.mubr.bf16.mxu0 0
          %1324 = vmatmul.mubr.bf16.gmra.mxu0 %v1227
          %v1325 = vpop.f32.mrf.mxu0
          %v1326 = vadd.f32 0.0, %v1325
          %v1327 = vpop.f32.mrf.mxu0
          %v1328 = vpop.f32.mrf.mxu0
          %v1329 = vadd.f32 0.0, %v1328
          %v1330 = vpop.f32.mrf.mxu0
          %1331 = vmatprep.mubr.bf16.mxu0 0
          %1332 = vmatmul.mubr.bf16.gmra.mxu0 %v1228
          %v1333 = vpop.f32.mrf.mxu0
          %v1334 = vadd.f32 0.0, %v1333
          %v1335 = vpop.f32.mrf.mxu0
          %v1336 = vpop.f32.mrf.mxu0
          %v1337 = vadd.f32 0.0, %v1336
          %v1338 = vpop.f32.mrf.mxu0
          %1339 = vmatprep.mubr.bf16.mxu0 0
          %1340 = vmatmul.mubr.bf16.gmra.mxu0 %v1229
          %v1341 = vpop.f32.mrf.mxu0
          %v1342 = vadd.f32 0.0, %v1341
          %v1343 = vpop.f32.mrf.mxu0
          %v1344 = vpop.f32.mrf.mxu0
          %v1345 = vadd.f32 0.0, %v1344
          %v1346 = vpop.f32.mrf.mxu0
          %1347 = vmatprep.mubr.bf16.mxu0 0
          %1348 = vmatmul.mubr.bf16.gmra.mxu0 %v1230
          %v1349 = vpop.f32.mrf.mxu0
          %v1350 = vadd.f32 0.0, %v1349
          %v1351 = vpop.f32.mrf.mxu0
          %v1352 = vpop.f32.mrf.mxu0
          %v1353 = vadd.f32 0.0, %v1352
          %v1354 = vpop.f32.mrf.mxu0
          %1355 = vmatprep.mubr.bf16.mxu0 0
          %1356 = vmatmul.mubr.bf16.gmra.mxu0 %v1231
          %v1357 = vpop.f32.mrf.mxu0
          %v1358 = vadd.f32 0.0, %v1357
          %v1359 = vpop.f32.mrf.mxu0
          %v1360 = vpop.f32.mrf.mxu0
          %v1361 = vadd.f32 0.0, %v1360
          %v1362 = vpop.f32.mrf.mxu0
          %1363 = vmatprep.mubr.bf16.mxu0 0
          %1364 = vmatmul.mubr.bf16.gmra.mxu0 %v1232
          %v1365 = vpop.f32.mrf.mxu0
          %v1366 = vadd.f32 0.0, %v1365
          %v1367 = vpop.f32.mrf.mxu0
          %v1368 = vpop.f32.mrf.mxu0
          %v1369 = vadd.f32 0.0, %v1368
          %v1370 = vpop.f32.mrf.mxu0
          %1371 = vmatprep.mubr.bf16.mxu0 0
          %1372 = vmatmul.mubr.bf16.gmra.mxu0 %v1233
          %v1373 = vpop.f32.mrf.mxu0
          %v1374 = vadd.f32 0.0, %v1373
          %v1375 = vpop.f32.mrf.mxu0
          %v1376 = vpop.f32.mrf.mxu0
          %v1377 = vadd.f32 0.0, %v1376
          %v1378 = vpop.f32.mrf.mxu0
          %1379 = vmatprep.mubr.bf16.mxu0 0
          %1380 = vmatmul.mubr.bf16.gmra.mxu0 %v1234
          %v1381 = vpop.f32.mrf.mxu0
          %v1382 = vadd.f32 0.0, %v1381
          %v1383 = vpop.f32.mrf.mxu0
          %v1384 = vpop.f32.mrf.mxu0
          %v1385 = vadd.f32 0.0, %v1384
          %v1386 = vpop.f32.mrf.mxu0
          %1387 = vdwg.mxu0
          %v1388 = vadd.f32 %v1147, %v1326
          %v1389 = vadd.f32 %v1148, %v1329
          %v1390 = vadd.f32 %v1149, %v1334
          %v1391 = vadd.f32 %v1150, %v1337
          %v1392 = vadd.f32 %v1151, %v1342
          %v1393 = vadd.f32 %v1152, %v1345
          %v1394 = vadd.f32 %v1153, %v1350
          %v1395 = vadd.f32 %v1154, %v1353
          %v1396 = vadd.f32 %v1155, %v1358
          %v1397 = vadd.f32 %v1156, %v1361
          %v1398 = vadd.f32 %v1157, %v1366
          %v1399 = vadd.f32 %v1158, %v1369
          %v1400 = vadd.f32 %v1159, %v1374
          %v1401 = vadd.f32 %v1160, %v1377
          %v1402 = vadd.f32 %v1161, %v1382
          %v1403 = vadd.f32 %v1162, %v1385
          %1404 = vst [vmem:[%s642] sm:$0xff] %v1388
          %1405 = vst [vmem:[%s642 + $0x8] sm:$0xff] %v1389
          %1406 = vst [vmem:[%s642 + $0x10] sm:$0xff] %v1390
          %1407 = vst [vmem:[%s642 + $0x18] sm:$0xff] %v1391
          %1408 = vst [vmem:[%s642 + $0x20] sm:$0xff] %v1392
          %1409 = vst [vmem:[%s642 + $0x28] sm:$0xff] %v1393
          %1410 = vst [vmem:[%s642 + $0x30] sm:$0xff] %v1394
          %1411 = vst [vmem:[%s642 + $0x38] sm:$0xff] %v1395
          %1412 = vst [vmem:[%s642 + $0x40] sm:$0xff] %v1396
          %1413 = vst [vmem:[%s642 + $0x48] sm:$0xff] %v1397
          %1414 = vst [vmem:[%s642 + $0x50] sm:$0xff] %v1398
          %1415 = vst [vmem:[%s642 + $0x58] sm:$0xff] %v1399
          %1416 = vst [vmem:[%s642 + $0x60] sm:$0xff] %v1400
          %1417 = vst [vmem:[%s642 + $0x68] sm:$0xff] %v1401
          %1418 = vst [vmem:[%s642 + $0x70] sm:$0xff] %v1402
          %1419 = vst [vmem:[%s642 + $0x78] sm:$0xff] %v1403
        $region52: #{tpu_custom_call.1} parent=43 // pred_fallthru
          _
        %s1420 = sand.u32 %s326, 1
        %s1421 = scalar_lea.sflag [#allocation8], %s1420
        %s1422 = sand.u32 %s326, 1
        %s1423 = smul.addr %s1422, 128
        %s1424 = scalar_lea.vmem [#allocation7], %s1423
        // Predicated region
        $region53: #{tpu_custom_call.1} parent=43 // pred_check
          %p1425 = pneg %p336
        $region54: #{tpu_custom_call.1} parent=43 // pred_check_branch
          %1427 = sbr.rel (%p1425) target = $region56
        $region55: #{tpu_custom_call.1} parent=43 // pred_region
          %s1428 = smul.u32 16, %s42
          %s1430 = ssub.s32 2048, 2048
          %1431 = vsyncadd %s1421, %s1430
          %s1432 = smul.addr %s1428, 2
          %s1433 = sadd.s32 %s43, %s1432
          %s1434 = smul.addr %s1433, 128
          %s1435 = scalar_lea.hbm %s9, %s1434
          %s1436 = sshll.u32 %s1424, 4
          %s1437 = int_to_ptr.vmem [resolvable:$true] %s1436
          %1442 = dma.vmem_to_hbm [thread:$0]  %s1437, 2048, %s1435, %s1421, 128, 256, 8
        $region56: #{tpu_custom_call.1} parent=43 // pred_fallthru
          _
      $region44: #{tpu_custom_call.1} parent=5 // pred_fallthru
        _
      %p1443 = scmp.le.s32.totalorder 2, %s32
      // Predicated region
      $region57: #{tpu_custom_call.1} parent=5 // pred_check
        %p1444 = pneg %p1443
      $region58: #{tpu_custom_call.1} parent=5 // pred_check_branch
        %1446 = sbr.rel (%p1444) target = $region60
      $region59: #{tpu_custom_call.1} parent=5 // pred_region
        %s1447 = ssub.s32 %s32, 2
        // Predicated region
        $region61: #{tpu_custom_call.1} parent=59 // pred_check
          %p1448 = pneg %p342
        $region62: #{tpu_custom_call.1} parent=59 // pred_check_branch
          %1450 = sbr.rel (%p1448) target = $region64
        $region63: #{tpu_custom_call.1} parent=59 // pred_region
          %s1451 = sand.u32 %s327, 1
          %s1452 = scalar_lea.sflag [#allocation8], %s1451
          %s1453 = sand.u32 %s327, 1
          %s1454 = smul.addr %s1453, 128
          %s1455 = scalar_lea.vmem [#allocation7], %s1454
          %1456 = dma.done %s1452, 2048
        $region64: #{tpu_custom_call.1} parent=59 // pred_fallthru
          _
      $region60: #{tpu_custom_call.1} parent=5 // pred_fallthru
        _
    $region6: #{tpu_custom_call.1} parent=1 // loop_footer
      %s36 = sadd.s32 1, %s32
    $region7: #{tpu_custom_call.1} parent=1 // loop_footer_branch
      %31 = sbr.rel target = $region3
    $region8: #{tpu_custom_call.1} parent=1 // loop_exit
      _
    %1457 = vsyncpa [#allocation8], 1
    %s1458 = scalar_lea.sflag [#allocation8], 1
    %1459 = vsyncpa %s1458, 1

</llo_original>
